<compile_context>
chip_gen: v5e
topology: v5e:2x2
jax: 0.10.0
libtpu: 0.0.40
codegen_flags: <defaults>
</compile_context>

<pallas_src>
import functools

import jax
import jax.numpy as jnp
from jax import lax
from jax.experimental import pallas as pl
from jax.experimental.pallas import tpu as pltpu

LANE = 128


def _round_up(x, m):
    return (x + m - 1) // m * m


@functools.lru_cache(maxsize=None)
def _vmem_capacity_bytes():
    # Generation-aware VMEM sizing (128 MiB on v5e/v6e, 64 MiB per core on v7x).
    try:
        return int(pltpu.get_tpu_info().vmem_capacity_bytes)
    except Exception:
        return 64 * 1024 * 1024        # conservative fallback (v7x-sized)


def _vmem_limit_bytes():
    return min(_vmem_capacity_bytes() * 3 // 4, 96 * 1024 * 1024)


@functools.lru_cache(maxsize=None)
def _num_tensorcores():
    # v7x has two TensorCores per chip; batch-shard the recurrence across them.
    try:
        kind = jax.devices()[0].device_kind.lower()
    except Exception:
        return 1
    return 2 if "v7" in kind else 1


def _largest_divisor_leq(n, cap):
    cap = max(1, min(cap, n))
    for d in range(cap, 0, -1):
        if n % d == 0:
            return d
    return 1


# -----------------------------------------------------------------------------
# Fused per-layer kernel: chunk input projection (parallel MXU matmul into VMEM
# scratch) + serial LSTM recurrence.  Gate order follows PyTorch: [i, f, g, o],
# each gate block padded to Hp (= k*128) lanes so per-gate slices are lane-aligned.
# -----------------------------------------------------------------------------
def _lstm_chunk_body(x_ref, wih_ref, b_ref, whh_ref, gx_ref, h_ref, c_ref, *,
                     seq_len, needs_mask, unroll, compute_dtype, out_ref=None):
    t_idx = pl.program_id(1)

    @pl.when(t_idx == 0)
    def _():
        h_ref[...] = jnp.zeros_like(h_ref)
        c_ref[...] = jnp.zeros_like(c_ref)

    tt, bb, din = x_ref.shape
    hp = whh_ref.shape[0]

    # Fused per-chunk input projection: one parallel MXU matmul off the serial
    # path; the (tt, bb, 4*hp) result lives only in VMEM scratch (no HBM trip).
    x2d = x_ref[...].reshape(tt * bb, din)
    gx = jnp.dot(x2d, wih_ref[...], preferred_element_type=jnp.float32) + b_ref[...]
    gx_ref[...] = gx.reshape(tt, bb, 4 * hp)

    # TODO(synk): hold W_hh in the MXU staging registers across the time loop
    # (pltpu.matmul_push_rhs / matmul_acc_lhs / matmul_pop) to drop the per-step
    # weight push; biggest relative win on v5e's 128-wide MXU.
    whh = whh_ref[...]
    t0 = t_idx * tt

    def step(s, carry):
        h, c = carry
        gates = gx_ref[s] + jnp.dot(h.astype(compute_dtype), whh,
                                    preferred_element_type=jnp.float32)
        i = jax.nn.sigmoid(gates[:, 0 * hp:1 * hp])    # lane-aligned gate slices
        f = jax.nn.sigmoid(gates[:, 1 * hp:2 * hp])
        g = jnp.tanh(gates[:, 2 * hp:3 * hp])
        o = jax.nn.sigmoid(gates[:, 3 * hp:4 * hp])
        c_new = f * c + i * g
        h_new = o * jnp.tanh(c_new)
        if needs_mask:                                 # only emitted for ragged tails
            valid = (t0 + s) < seq_len
            h_new = jnp.where(valid, h_new, h)
            c_new = jnp.where(valid, c_new, c)
        if out_ref is not None:
            out_ref[s] = h_new.astype(out_ref.dtype)
        return h_new, c_new

    # unroll=4: cross-iteration visibility so step s+1's MXU push overlaps the
    # VPU/EUP gate math and the store of step s.
    h, c = lax.fori_loop(0, tt, step, (h_ref[...], c_ref[...]), unroll=unroll)
    h_ref[...] = h
    c_ref[...] = c
    return h


def _lstm_seq_kernel(x_ref, wih_ref, b_ref, whh_ref, out_ref, gx_ref, h_ref, c_ref,
                     *, seq_len, needs_mask, unroll, compute_dtype):
    _lstm_chunk_body(x_ref, wih_ref, b_ref, whh_ref, gx_ref, h_ref, c_ref,
                     seq_len=seq_len, needs_mask=needs_mask, unroll=unroll,
                     compute_dtype=compute_dtype, out_ref=out_ref)


def _lstm_fc_kernel(x_ref, wih_ref, b_ref, whh_ref, fcw_ref, fcb_ref, logits_ref,
                    gx_ref, h_ref, c_ref,
                    *, seq_len, needs_mask, unroll, compute_dtype):
    h = _lstm_chunk_body(x_ref, wih_ref, b_ref, whh_ref, gx_ref, h_ref, c_ref,
                         seq_len=seq_len, needs_mask=needs_mask, unroll=unroll,
                         compute_dtype=compute_dtype, out_ref=None)

    # Fused classifier epilogue: logits = h_T @ W_fc^T + b_fc, written once on the
    # final time-chunk; the last layer's (T, B, Hp) sequence is never materialized.
    @pl.when(pl.program_id(1) == pl.num_programs(1) - 1)
    def _():
        logits_ref[...] = (jnp.dot(h.astype(compute_dtype), fcw_ref[...],
                                   preferred_element_type=jnp.float32)
                           + fcb_ref[...])


# -----------------------------------------------------------------------------
# Per-layer pallas_call wrapper.
# -----------------------------------------------------------------------------
def _lstm_recurrence(x_tbd, layer, *, Bb, time_chunk=None, fc=None):
    """One LSTM layer over a time-major (T, B_pad, Din) input.

    fc=None          -> returns the hidden sequence (T, B_pad, Hp) in compute dtype
    fc=(fcw_t, fcb)  -> returns fused classifier logits (B_pad, C) in f32
    """
    T, B_pad, Din = x_tbd.shape
    wih_t, whh_t, bias = layer["wih_t"], layer["whh_t"], layer["bias"]
    Hp = whh_t.shape[0]
    G = 4 * Hp
    compute_dtype = whh_t.dtype
    cbytes = jnp.dtype(compute_dtype).itemsize
    out_bytes = cbytes if fc is None else 0

    vmem_limit = _vmem_limit_bytes()
    # Resident VMEM: weights/bias (assumed double-buffered by the pipeline even
    # though their block index never changes) + the carried h/c scratch.
    # TODO(synk): pipeline_mode=pl.Buffered(1) on the constant-index weight specs
    # would halve this; kept off until single-buffered resident blocks are verified
    # on the target jax version, so the budget stays conservative for v7x.
    resident = 2 * (Din * G + Hp * G) * cbytes + 2 * G * 4 + 2 * Bb * Hp * 4
    if fc is not None:
        C_res = fc[0].shape[1]
        resident += 2 * (Hp * C_res * cbytes + C_res * 4)
    budget = vmem_limit - resident - 2 * 1024 * 1024

    if time_chunk is not None:
        tt = max(1, min(int(time_chunk), T))
    else:
        # double-buffered streamed x (+ seq out) blocks + the single gx scratch
        per_t = Bb * (2 * Din * cbytes + G * 4 + 2 * Hp * out_bytes)
        cap = int(max(1, min(T, 256, budget // per_t)))
        tt = _largest_divisor_leq(T, cap)       # prefer mask-free divisor chunks
        if tt < max(1, cap // 2):               # no useful divisor: accept ragged tail
            tt = cap
    needs_mask = (T % tt) != 0
    unroll = min(tt, 4)

    grid = (B_pad // Bb, pl.cdiv(T, tt))
    cparams = pltpu.CompilerParams(
        dimension_semantics=("parallel", "arbitrary"),
        vmem_limit_bytes=vmem_limit)
    scratch = [pltpu.VMEM((tt, Bb, G), jnp.float32),   # per-chunk gate pre-acts
               pltpu.VMEM((Bb, Hp), jnp.float32),      # h carry (f32 always)
               pltpu.VMEM((Bb, Hp), jnp.float32)]      # c carry (f32 always)

    x_spec = pl.BlockSpec((tt, Bb, Din), lambda b, t: (t, b, 0))
    wih_spec = pl.BlockSpec((Din, G), lambda b, t: (0, 0))    # resident weights
    bias_spec = pl.BlockSpec((1, G), lambda b, t: (0, 0))
    whh_spec = pl.BlockSpec((Hp, G), lambda b, t: (0, 0))

    if fc is None:
        kernel = functools.partial(
            _lstm_seq_kernel, seq_len=T, needs_mask=needs_mask,
            unroll=unroll, compute_dtype=compute_dtype)
        return pl.pallas_call(
            kernel,
            out_shape=jax.ShapeDtypeStruct((T, B_pad, Hp), compute_dtype),
            grid=grid,
            in_specs=[x_spec, wih_spec, bias_spec, whh_spec],
            out_specs=pl.BlockSpec((tt, Bb, Hp), lambda b, t: (t, b, 0)),
            scratch_shapes=scratch,
            compiler_params=cparams,
        )(x_tbd, wih_t, bias, whh_t)

    fcw_t, fcb = fc
    C = fcw_t.shape[1]
    kernel = functools.partial(
        _lstm_fc_kernel, seq_len=T, needs_mask=needs_mask,
        unroll=unroll, compute_dtype=compute_dtype)
    return pl.pallas_call(
        kernel,
        out_shape=jax.ShapeDtypeStruct((B_pad, C), jnp.float32),
        grid=grid,
        in_specs=[x_spec, wih_spec, bias_spec, whh_spec,
                  pl.BlockSpec((Hp, C), lambda b, t: (0, 0)),
                  pl.BlockSpec((1, C), lambda b, t: (0, 0))],
        out_specs=pl.BlockSpec((Bb, C), lambda b, t: (b, 0)),
        scratch_shapes=scratch,
        compiler_params=cparams,
    )(x_tbd, wih_t, bias, whh_t, fcw_t, fcb)


# -----------------------------------------------------------------------------
# One-time parameter preprocessing: transpose weights, fold biases, pad the
# hidden/gate axes to the 128-lane boundary, and pre-cast matmul operands to the
# compute dtype.  Padding is exact: padded gate pre-activations are always 0, so
# padded lanes of h/c stay 0 and padded fc rows contribute nothing.
# -----------------------------------------------------------------------------
def prepare_params(params, *, compute_dtype=jnp.bfloat16, lane=LANE):
    H = params["lstm"][0]["w_hh"].shape[1]
    Hp = _round_up(H, lane)

    layers = []
    for li, layer in enumerate(params["lstm"]):
        w_ih = jnp.asarray(layer["w_ih"], jnp.float32)        # (4H, Din)
        w_hh = jnp.asarray(layer["w_hh"], jnp.float32)        # (4H, H)
        b = (jnp.asarray(layer["b_ih"], jnp.float32)
             + jnp.asarray(layer["b_hh"], jnp.float32))       # (4H,)
        Din = w_ih.shape[1]
        Din_p = Din if li == 0 else Hp     # layers > 0 consume the padded hidden

        wih_t = w_ih.T.reshape(Din, 4, H)
        wih_t = jnp.pad(wih_t, ((0, Din_p - Din), (0, 0), (0, Hp - H)))
        wih_t = wih_t.reshape(Din_p, 4 * Hp)

        whh_t = w_hh.T.reshape(H, 4, H)
        whh_t = jnp.pad(whh_t, ((0, Hp - H), (0, 0), (0, Hp - H)))
        whh_t = whh_t.reshape(Hp, 4 * Hp)

        bias = jnp.pad(b.reshape(4, H), ((0, 0), (0, Hp - H))).reshape(1, 4 * Hp)
        layers.append({"wih_t": wih_t.astype(compute_dtype),   # pre-cast once
                       "whh_t": whh_t.astype(compute_dtype),
                       "bias": bias})                          # bias stays f32

    fc_w = jnp.asarray(params["fc_w"], jnp.float32)            # (C, H)
    fc_b = jnp.asarray(params["fc_b"], jnp.float32)            # (C,)
    fcw_t = jnp.pad(fc_w.T, ((0, Hp - H), (0, 0))).astype(compute_dtype)  # (Hp, C)
    fcb = fc_b.reshape(1, fc_b.shape[0])
    return {"layers": layers, "fcw_t": fcw_t, "fcb": fcb}


# -----------------------------------------------------------------------------
# Full model: LSTMClassifier.forward
# -----------------------------------------------------------------------------
def lstm_classifier_forward(x_btd, prepared, *, time_chunk=None, block_b=None):
    """x_btd: (B, T, input_dim) batch_first.  Returns logits (B, num_classes) f32."""
    B, T, _ = x_btd.shape
    compute_dtype = prepared["layers"][0]["whh_t"].dtype

    # Batch padding / sharding: always pad to 8 sublanes (a (2, Hp) tile wastes
    # 75% of every vreg row); on 2-TC chips (v7x) shard the batch across cores
    # via the leading "parallel" grid axis.
    ncores = _num_tensorcores()
    if block_b is not None:
        Bb = max(8, _round_up(int(block_b), 8))
        B_pad = _round_up(B, Bb)
    elif ncores > 1 and B >= 16:
        B_pad = _round_up(B, 8 * ncores)
        Bb = B_pad // ncores
    else:
        B_pad = _round_up(B, 8)
        Bb = B_pad

    x = jnp.transpose(x_btd, (1, 0, 2)).astype(compute_dtype)   # time-major
    if B_pad != B:
        x = jnp.pad(x, ((0, 0), (0, B_pad - B), (0, 0)))

    seq = x
    # TODO(synk): chain consecutive LSTM layers per time-chunk inside one kernel so
    # the inter-layer sequence never leaves VMEM (it is already stored in the
    # bf16/compute dtype here, halving that traffic vs f32).
    for layer in prepared["layers"][:-1]:
        seq = _lstm_recurrence(seq, layer, Bb=Bb, time_chunk=time_chunk)

    logits = _lstm_recurrence(seq, prepared["layers"][-1], Bb=Bb,
                              time_chunk=time_chunk,
                              fc=(prepared["fcw_t"], prepared["fcb"]))
    return logits[:B]


# -----------------------------------------------------------------------------
# Pure-JAX reference (unpadded, f32, same math) for the sanity check.
# -----------------------------------------------------------------------------
def _reference_forward(x_btd, params):
    x = jnp.transpose(x_btd, (1, 0, 2)).astype(jnp.float32)
    hN = None
    for layer in params["lstm"]:
        w_ih, w_hh = layer["w_ih"], layer["w_hh"]
        b = layer["b_ih"] + layer["b_hh"]
        H = w_hh.shape[1]
        B = x.shape[1]

        def step(carry, x_t):
            h, c = carry
            gates = x_t @ w_ih.T + h @ w_hh.T + b
            i = jax.nn.sigmoid(gates[:, 0 * H:1 * H])
            f = jax.nn.sigmoid(gates[:, 1 * H:2 * H])
            g = jnp.tanh(gates[:, 2 * H:3 * H])
            o = jax.nn.sigmoid(gates[:, 3 * H:4 * H])
            c_new = f * c + i * g
            h_new = o * jnp.tanh(c_new)
            return (h_new, c_new), h_new

        (hT, _), outs = lax.scan(step, (jnp.zeros((B, H)), jnp.zeros((B, H))), x)
        x, hN = outs, hT
    return hN @ params["fc_w"].T + params["fc_b"]


# -----------------------------------------------------------------------------
# PyTorch-style parameter init: uniform(-1/sqrt(H), 1/sqrt(H))
# -----------------------------------------------------------------------------
def init_params(key, input_dim, hidden_dim, num_layers, num_classes):
    bound = 1.0 / (hidden_dim ** 0.5)
    params = {"lstm": []}
    for layer in range(num_layers):
        d_in = input_dim if layer == 0 else hidden_dim
        key, k1, k2, k3, k4 = jax.random.split(key, 5)
        params["lstm"].append({
            "w_ih": jax.random.uniform(k1, (4 * hidden_dim, d_in),
                                       jnp.float32, -bound, bound),
            "w_hh": jax.random.uniform(k2, (4 * hidden_dim, hidden_dim),
                                       jnp.float32, -bound, bound),
            "b_ih": jax.random.uniform(k3, (4 * hidden_dim,),
                                       jnp.float32, -bound, bound),
            "b_hh": jax.random.uniform(k4, (4 * hidden_dim,),
                                       jnp.float32, -bound, bound),
        })
    key, k1, k2 = jax.random.split(key, 3)
    params["fc_w"] = jax.random.uniform(k1, (num_classes, hidden_dim),
                                        jnp.float32, -bound, bound)
    params["fc_b"] = jax.random.uniform(k2, (num_classes,),
                                        jnp.float32, -bound, bound)
    return params


if __name__ == "__main__":
    B, T, INPUT_DIM, HIDDEN_DIM, NUM_LAYERS, NUM_CLASSES = 2, 8, 16, 32, 2, 4

    key = jax.random.PRNGKey(0)
    key, kx = jax.random.split(key)
    x = jax.random.normal(kx, (B, T, INPUT_DIM), jnp.float32)
    params = init_params(key, INPUT_DIM, HIDDEN_DIM, NUM_LAYERS, NUM_CLASSES)

    ref = jax.block_until_ready(_reference_forward(x, params))

    # Exact f32 verification path: time_chunk=2 exercises the carried h/c scratch
    # across 4 time-chunks (mask-free), time_chunk=3 exercises the ragged tail.
    prep_f32 = prepare_params(params, compute_dtype=jnp.float32)
    out_f32 = jax.block_until_ready(
        jax.jit(functools.partial(lstm_classifier_forward, time_chunk=2))(x, prep_f32))
    assert out_f32.shape == (B, NUM_CLASSES)
    assert jnp.allclose(out_f32, ref, atol=1e-4, rtol=1e-4), "f32 mismatch vs reference"

    out_rag = jax.block_until_ready(
        jax.jit(functools.partial(lstm_classifier_forward, time_chunk=3))(x, prep_f32))
    assert jnp.allclose(out_rag, ref, atol=1e-4, rtol=1e-4), "ragged-chunk mismatch"

    # Default bf16 compute path (MXU-friendly operands, f32 accumulation).
    prep_bf16 = prepare_params(params)                 # compute_dtype=bf16 default
    out_bf16 = jax.block_until_ready(jax.jit(lstm_classifier_forward)(x, prep_bf16))
    assert out_bf16.shape == (B, NUM_CLASSES)
    assert jnp.allclose(out_bf16, ref, atol=5e-2, rtol=5e-2), "bf16 mismatch vs reference"

    print("KERNEL_OK")
</pallas_src>

<mosaic_0001>
module attributes {stable_mosaic.version = 11 : i64} {
  func.func @_lstm_seq_kernel(%arg0: i32, %arg1: i32, %arg2: memref<2x8x16xf32, #tpu.memory_space<vmem>>, %arg3: memref<16x512xf32, #tpu.memory_space<vmem>>, %arg4: memref<1x512xf32, #tpu.memory_space<vmem>>, %arg5: memref<128x512xf32, #tpu.memory_space<vmem>>, %arg6: memref<2x8x128xf32, #tpu.memory_space<vmem>>, %arg7: memref<2x8x512xf32, #tpu.memory_space<vmem>>, %arg8: memref<8x128xf32, #tpu.memory_space<vmem>>, %arg9: memref<8x128xf32, #tpu.memory_space<vmem>>) attributes {dimension_semantics = [#tpu.dimension_semantics<parallel>, #tpu.dimension_semantics<arbitrary>], iteration_bounds = array<i64: 1, 4>, scalar_prefetch = 0 : i64, scratch_operands = 3 : i64, tpu.core_type = #tpu.core_type<tc>, window_params = [{transform_indices = @transform_0, window_bounds = array<i64: 2, 8, 16>}, {pipeline_mode = #tpu.pipeline_mode<synchronous>, transform_indices = @transform_1, window_bounds = array<i64: 16, 512>}, {pipeline_mode = #tpu.pipeline_mode<synchronous>, transform_indices = @transform_2, window_bounds = array<i64: 1, 512>}, {pipeline_mode = #tpu.pipeline_mode<synchronous>, transform_indices = @transform_3, window_bounds = array<i64: 128, 512>}, {transform_indices = @transform_4, window_bounds = array<i64: 2, 8, 128>}]} {
    %c0_i32 = arith.constant 0 : i32
    %0 = arith.cmpi eq, %arg1, %c0_i32 : i32
    %1 = arith.extui %0 : i1 to i32
    %c0_i32_0 = arith.constant 0 : i32
    %2 = arith.cmpi ne, %1, %c0_i32_0 : i32
    scf.if %2 {
      %cst_37 = arith.constant 0.000000e+00 : f32
      %85 = vector.broadcast %cst_37 : f32 to vector<8x128xf32>
      %c0_38 = arith.constant 0 : index
      %c0_39 = arith.constant 0 : index
      %86 = vector.load %arg8[%c0_38, %c0_39] : memref<8x128xf32, #tpu.memory_space<vmem>>, vector<8x128xf32>
      tpu.vector_store %arg8[%c0_38, %c0_39], %85 {strides = array<i32>} : memref<8x128xf32, #tpu.memory_space<vmem>>, vector<8x128xf32>,
      %cst_40 = arith.constant 0.000000e+00 : f32
      %87 = vector.broadcast %cst_40 : f32 to vector<8x128xf32>
      %c0_41 = arith.constant 0 : index
      %c0_42 = arith.constant 0 : index
      %88 = vector.load %arg9[%c0_41, %c0_42] : memref<8x128xf32, #tpu.memory_space<vmem>>, vector<8x128xf32>
      tpu.vector_store %arg9[%c0_41, %c0_42], %87 {strides = array<i32>} : memref<8x128xf32, #tpu.memory_space<vmem>>, vector<8x128xf32>,
    } else {
    }
    %c0 = arith.constant 0 : index
    %c0_1 = arith.constant 0 : index
    %c0_2 = arith.constant 0 : index
    %3 = vector.load %arg2[%c0, %c0_1, %c0_2] : memref<2x8x16xf32, #tpu.memory_space<vmem>>, vector<2x8x16xf32>
    %4 = vector.shape_cast %3 : vector<2x8x16xf32> to vector<16x16xf32>
    %c0_3 = arith.constant 0 : index
    %c0_4 = arith.constant 0 : index
    %5 = vector.load %arg3[%c0_3, %c0_4] : memref<16x512xf32, #tpu.memory_space<vmem>>, vector<16x512xf32>
    %cst = arith.constant dense<0.000000e+00> : vector<16x512xf32>
    %6 = tpu.matmul %4, %5, %cst {dimension_numbers = #tpu.dot_dimension_numbers<[1], [0], [0], [1], [0, 0, 1, 1], [], []>} : vector<16x16xf32>, vector<16x512xf32>, vector<16x512xf32> -> vector<16x512xf32>
    %c0_5 = arith.constant 0 : index
    %c0_6 = arith.constant 0 : index
    %7 = vector.load %arg4[%c0_5, %c0_6] : memref<1x512xf32, #tpu.memory_space<vmem>>, vector<1x512xf32>
    %8 = vector.broadcast %7 : vector<1x512xf32> to vector<16x512xf32>
    %9 = arith.addf %6, %8 : vector<16x512xf32>
    %10 = vector.shape_cast %9 : vector<16x512xf32> to vector<2x8x512xf32>
    %c0_7 = arith.constant 0 : index
    %c0_8 = arith.constant 0 : index
    %c0_9 = arith.constant 0 : index
    %11 = vector.load %arg7[%c0_7, %c0_8, %c0_9] : memref<2x8x512xf32, #tpu.memory_space<vmem>>, vector<2x8x512xf32>
    tpu.vector_store %arg7[%c0_7, %c0_8, %c0_9], %10 {strides = array<i32>} : memref<2x8x512xf32, #tpu.memory_space<vmem>>, vector<2x8x512xf32>,
    %c0_10 = arith.constant 0 : index
    %c0_11 = arith.constant 0 : index
    %12 = vector.load %arg5[%c0_10, %c0_11] : memref<128x512xf32, #tpu.memory_space<vmem>>, vector<128x512xf32>
    %c0_12 = arith.constant 0 : index
    %c0_13 = arith.constant 0 : index
    %13 = vector.load %arg8[%c0_12, %c0_13] : memref<8x128xf32, #tpu.memory_space<vmem>>, vector<8x128xf32>
    %c0_14 = arith.constant 0 : index
    %c0_15 = arith.constant 0 : index
    %14 = vector.load %arg9[%c0_14, %c0_15] : memref<8x128xf32, #tpu.memory_space<vmem>>, vector<8x128xf32>
    %c0_i32_16 = arith.constant 0 : i32
    %15 = arith.index_cast %c0_i32_16 : i32 to index
    %c0_17 = arith.constant 0 : index
    %c0_18 = arith.constant 0 : index
    %16 = vector.load %arg7[%15, %c0_17, %c0_18] : memref<2x8x512xf32, #tpu.memory_space<vmem>>, vector<1x8x512xf32>
    %17 = vector.shape_cast %16 : vector<1x8x512xf32> to vector<8x512xf32>
    %cst_19 = arith.constant dense<0.000000e+00> : vector<8x512xf32>
    %18 = tpu.matmul %13, %12, %cst_19 {dimension_numbers = #tpu.dot_dimension_numbers<[1], [0], [0], [1], [0, 0, 1, 1], [], []>} : vector<8x128xf32>, vector<128x512xf32>, vector<8x512xf32> -> vector<8x512xf32>
    %19 = arith.addf %17, %18 : vector<8x512xf32>
    %20 = vector.extract_strided_slice %19 {offsets = [0, 0], sizes = [8, 128], strides = [1, 1]} : vector<8x512xf32> to vector<8x128xf32>
    %21 = arith.negf %20 : vector<8x128xf32>
    %22 = math.exp %21 : vector<8x128xf32>
    %cst_20 = arith.constant 1.000000e+00 : f32
    %23 = vector.broadcast %cst_20 : f32 to vector<8x128xf32>
    %24 = arith.addf %23, %22 : vector<8x128xf32>
    %25 = arith.divf %23, %24 : vector<8x128xf32>
    %26 = vector.extract_strided_slice %19 {offsets = [0, 128], sizes = [8, 128], strides = [1, 1]} : vector<8x512xf32> to vector<8x128xf32>
    %27 = arith.negf %26 : vector<8x128xf32>
    %28 = math.exp %27 : vector<8x128xf32>
    %cst_21 = arith.constant 1.000000e+00 : f32
    %29 = vector.broadcast %cst_21 : f32 to vector<8x128xf32>
    %30 = arith.addf %29, %28 : vector<8x128xf32>
    %31 = arith.divf %29, %30 : vector<8x128xf32>
    %32 = vector.extract_strided_slice %19 {offsets = [0, 256], sizes = [8, 128], strides = [1, 1]} : vector<8x512xf32> to vector<8x128xf32>
    %33 = math.tanh %32 : vector<8x128xf32>
    %34 = vector.extract_strided_slice %19 {offsets = [0, 384], sizes = [8, 128], strides = [1, 1]} : vector<8x512xf32> to vector<8x128xf32>
    %35 = arith.negf %34 : vector<8x128xf32>
    %36 = math.exp %35 : vector<8x128xf32>
    %cst_22 = arith.constant 1.000000e+00 : f32
    %37 = vector.broadcast %cst_22 : f32 to vector<8x128xf32>
    %38 = arith.addf %37, %36 : vector<8x128xf32>
    %39 = arith.divf %37, %38 : vector<8x128xf32>
    %40 = arith.mulf %31, %14 : vector<8x128xf32>
    %41 = arith.mulf %25, %33 : vector<8x128xf32>
    %42 = arith.addf %40, %41 : vector<8x128xf32>
    %43 = math.tanh %42 : vector<8x128xf32>
    %44 = arith.mulf %39, %43 : vector<8x128xf32>
    %45 = arith.index_cast %c0_i32_16 : i32 to index
    %c0_23 = arith.constant 0 : index
    %c0_24 = arith.constant 0 : index
    %46 = vector.load %arg6[%45, %c0_23, %c0_24] : memref<2x8x128xf32, #tpu.memory_space<vmem>>, vector<1x8x128xf32>
    %47 = vector.shape_cast %46 : vector<1x8x128xf32> to vector<8x128xf32>
    %48 = vector.shape_cast %44 : vector<8x128xf32> to vector<1x8x128xf32>
    tpu.vector_store %arg6[%45, %c0_23, %c0_24], %48 {strides = array<i32>} : memref<2x8x128xf32, #tpu.memory_space<vmem>>, vector<1x8x128xf32>,
    %c1_i32 = arith.constant 1 : i32
    %49 = arith.index_cast %c1_i32 : i32 to index
    %c0_25 = arith.constant 0 : index
    %c0_26 = arith.constant 0 : index
    %50 = vector.load %arg7[%49, %c0_25, %c0_26] : memref<2x8x512xf32, #tpu.memory_space<vmem>>, vector<1x8x512xf32>
    %51 = vector.shape_cast %50 : vector<1x8x512xf32> to vector<8x512xf32>
    %cst_27 = arith.constant dense<0.000000e+00> : vector<8x512xf32>
    %52 = tpu.matmul %44, %12, %cst_27 {dimension_numbers = #tpu.dot_dimension_numbers<[1], [0], [0], [1], [0, 0, 1, 1], [], []>} : vector<8x128xf32>, vector<128x512xf32>, vector<8x512xf32> -> vector<8x512xf32>
    %53 = arith.addf %51, %52 : vector<8x512xf32>
    %54 = vector.extract_strided_slice %53 {offsets = [0, 0], sizes = [8, 128], strides = [1, 1]} : vector<8x512xf32> to vector<8x128xf32>
    %55 = arith.negf %54 : vector<8x128xf32>
    %56 = math.exp %55 : vector<8x128xf32>
    %cst_28 = arith.constant 1.000000e+00 : f32
    %57 = vector.broadcast %cst_28 : f32 to vector<8x128xf32>
    %58 = arith.addf %57, %56 : vector<8x128xf32>
    %59 = arith.divf %57, %58 : vector<8x128xf32>
    %60 = vector.extract_strided_slice %53 {offsets = [0, 128], sizes = [8, 128], strides = [1, 1]} : vector<8x512xf32> to vector<8x128xf32>
    %61 = arith.negf %60 : vector<8x128xf32>
    %62 = math.exp %61 : vector<8x128xf32>
    %cst_29 = arith.constant 1.000000e+00 : f32
    %63 = vector.broadcast %cst_29 : f32 to vector<8x128xf32>
    %64 = arith.addf %63, %62 : vector<8x128xf32>
    %65 = arith.divf %63, %64 : vector<8x128xf32>
    %66 = vector.extract_strided_slice %53 {offsets = [0, 256], sizes = [8, 128], strides = [1, 1]} : vector<8x512xf32> to vector<8x128xf32>
    %67 = math.tanh %66 : vector<8x128xf32>
    %68 = vector.extract_strided_slice %53 {offsets = [0, 384], sizes = [8, 128], strides = [1, 1]} : vector<8x512xf32> to vector<8x128xf32>
    %69 = arith.negf %68 : vector<8x128xf32>
    %70 = math.exp %69 : vector<8x128xf32>
    %cst_30 = arith.constant 1.000000e+00 : f32
    %71 = vector.broadcast %cst_30 : f32 to vector<8x128xf32>
    %72 = arith.addf %71, %70 : vector<8x128xf32>
    %73 = arith.divf %71, %72 : vector<8x128xf32>
    %74 = arith.mulf %65, %42 : vector<8x128xf32>
    %75 = arith.mulf %59, %67 : vector<8x128xf32>
    %76 = arith.addf %74, %75 : vector<8x128xf32>
    %77 = math.tanh %76 : vector<8x128xf32>
    %78 = arith.mulf %73, %77 : vector<8x128xf32>
    %79 = arith.index_cast %c1_i32 : i32 to index
    %c0_31 = arith.constant 0 : index
    %c0_32 = arith.constant 0 : index
    %80 = vector.load %arg6[%79, %c0_31, %c0_32] : memref<2x8x128xf32, #tpu.memory_space<vmem>>, vector<1x8x128xf32>
    %81 = vector.shape_cast %80 : vector<1x8x128xf32> to vector<8x128xf32>
    %82 = vector.shape_cast %78 : vector<8x128xf32> to vector<1x8x128xf32>
    tpu.vector_store %arg6[%79, %c0_31, %c0_32], %82 {strides = array<i32>} : memref<2x8x128xf32, #tpu.memory_space<vmem>>, vector<1x8x128xf32>,
    %c2_i32 = arith.constant 2 : i32
    %c0_33 = arith.constant 0 : index
    %c0_34 = arith.constant 0 : index
    %83 = vector.load %arg8[%c0_33, %c0_34] : memref<8x128xf32, #tpu.memory_space<vmem>>, vector<8x128xf32>
    tpu.vector_store %arg8[%c0_33, %c0_34], %78 {strides = array<i32>} : memref<8x128xf32, #tpu.memory_space<vmem>>, vector<8x128xf32>,
    %c0_35 = arith.constant 0 : index
    %c0_36 = arith.constant 0 : index
    %84 = vector.load %arg9[%c0_35, %c0_36] : memref<8x128xf32, #tpu.memory_space<vmem>>, vector<8x128xf32>
    tpu.vector_store %arg9[%c0_35, %c0_36], %76 {strides = array<i32>} : memref<8x128xf32, #tpu.memory_space<vmem>>, vector<8x128xf32>,
    return
  }
  func.func @transform_0(%arg0: i32, %arg1: i32) -> (i32, i32, i32) {
    %c0_i32 = arith.constant 0 : i32
    %c0_i32_0 = arith.constant 0 : i32
    return %arg1, %arg0, %c0_i32 : i32, i32, i32
  }
  func.func @transform_1(%arg0: i32, %arg1: i32) -> (i32, i32) {
    %c0_i32 = arith.constant 0 : i32
    %c0_i32_0 = arith.constant 0 : i32
    %c0_i32_1 = arith.constant 0 : i32
    return %c0_i32, %c0_i32_0 : i32, i32
  }
  func.func @transform_2(%arg0: i32, %arg1: i32) -> (i32, i32) {
    %c0_i32 = arith.constant 0 : i32
    %c0_i32_0 = arith.constant 0 : i32
    %c0_i32_1 = arith.constant 0 : i32
    return %c0_i32, %c0_i32_0 : i32, i32
  }
  func.func @transform_3(%arg0: i32, %arg1: i32) -> (i32, i32) {
    %c0_i32 = arith.constant 0 : i32
    %c0_i32_0 = arith.constant 0 : i32
    %c0_i32_1 = arith.constant 0 : i32
    return %c0_i32, %c0_i32_0 : i32, i32
  }
  func.func @transform_4(%arg0: i32, %arg1: i32) -> (i32, i32, i32) {
    %c0_i32 = arith.constant 0 : i32
    %c0_i32_0 = arith.constant 0 : i32
    return %arg1, %arg0, %c0_i32 : i32, i32, i32
  }
}

module attributes {stable_mosaic.version = 11 : i64} {
  func.func @_lstm_fc_kernel(%arg0: i32, %arg1: i32, %arg2: memref<2x8x128xf32, #tpu.memory_space<vmem>>, %arg3: memref<128x512xf32, #tpu.memory_space<vmem>>, %arg4: memref<1x512xf32, #tpu.memory_space<vmem>>, %arg5: memref<128x512xf32, #tpu.memory_space<vmem>>, %arg6: memref<128x4xf32, #tpu.memory_space<vmem>>, %arg7: memref<1x4xf32, #tpu.memory_space<vmem>>, %arg8: memref<8x4xf32, #tpu.memory_space<vmem>>, %arg9: memref<2x8x512xf32, #tpu.memory_space<vmem>>, %arg10: memref<8x128xf32, #tpu.memory_space<vmem>>, %arg11: memref<8x128xf32, #tpu.memory_space<vmem>>) attributes {dimension_semantics = [#tpu.dimension_semantics<parallel>, #tpu.dimension_semantics<arbitrary>], iteration_bounds = array<i64: 1, 4>, scalar_prefetch = 0 : i64, scratch_operands = 3 : i64, tpu.core_type = #tpu.core_type<tc>, window_params = [{transform_indices = @transform_0, window_bounds = array<i64: 2, 8, 128>}, {pipeline_mode = #tpu.pipeline_mode<synchronous>, transform_indices = @transform_1, window_bounds = array<i64: 128, 512>}, {pipeline_mode = #tpu.pipeline_mode<synchronous>, transform_indices = @transform_2, window_bounds = array<i64: 1, 512>}, {pipeline_mode = #tpu.pipeline_mode<synchronous>, transform_indices = @transform_3, window_bounds = array<i64: 128, 512>}, {pipeline_mode = #tpu.pipeline_mode<synchronous>, transform_indices = @transform_4, window_bounds = array<i64: 128, 4>}, {pipeline_mode = #tpu.pipeline_mode<synchronous>, transform_indices = @transform_5, window_bounds = array<i64: 1, 4>}, {transform_indices = @transform_6, window_bounds = array<i64: 8, 4>}]} {
    %c0_i32 = arith.constant 0 : i32
    %0 = arith.cmpi eq, %arg1, %c0_i32 : i32
    %1 = arith.extui %0 : i1 to i32
    %c0_i32_0 = arith.constant 0 : i32
    %2 = arith.cmpi ne, %1, %c0_i32_0 : i32
    scf.if %2 {
      %cst_34 = arith.constant 0.000000e+00 : f32
      %80 = vector.broadcast %cst_34 : f32 to vector<8x128xf32>
      %c0_35 = arith.constant 0 : index
      %c0_36 = arith.constant 0 : index
      %81 = vector.load %arg10[%c0_35, %c0_36] : memref<8x128xf32, #tpu.memory_space<vmem>>, vector<8x128xf32>
      tpu.vector_store %arg10[%c0_35, %c0_36], %80 {strides = array<i32>} : memref<8x128xf32, #tpu.memory_space<vmem>>, vector<8x128xf32>,
      %cst_37 = arith.constant 0.000000e+00 : f32
      %82 = vector.broadcast %cst_37 : f32 to vector<8x128xf32>
      %c0_38 = arith.constant 0 : index
      %c0_39 = arith.constant 0 : index
      %83 = vector.load %arg11[%c0_38, %c0_39] : memref<8x128xf32, #tpu.memory_space<vmem>>, vector<8x128xf32>
      tpu.vector_store %arg11[%c0_38, %c0_39], %82 {strides = array<i32>} : memref<8x128xf32, #tpu.memory_space<vmem>>, vector<8x128xf32>,
    } else {
    }
    %c0 = arith.constant 0 : index
    %c0_1 = arith.constant 0 : index
    %c0_2 = arith.constant 0 : index
    %3 = vector.load %arg2[%c0, %c0_1, %c0_2] : memref<2x8x128xf32, #tpu.memory_space<vmem>>, vector<2x8x128xf32>
    %4 = vector.shape_cast %3 : vector<2x8x128xf32> to vector<16x128xf32>
    %c0_3 = arith.constant 0 : index
    %c0_4 = arith.constant 0 : index
    %5 = vector.load %arg3[%c0_3, %c0_4] : memref<128x512xf32, #tpu.memory_space<vmem>>, vector<128x512xf32>
    %cst = arith.constant dense<0.000000e+00> : vector<16x512xf32>
    %6 = tpu.matmul %4, %5, %cst {dimension_numbers = #tpu.dot_dimension_numbers<[1], [0], [0], [1], [0, 0, 1, 1], [], []>} : vector<16x128xf32>, vector<128x512xf32>, vector<16x512xf32> -> vector<16x512xf32>
    %c0_5 = arith.constant 0 : index
    %c0_6 = arith.constant 0 : index
    %7 = vector.load %arg4[%c0_5, %c0_6] : memref<1x512xf32, #tpu.memory_space<vmem>>, vector<1x512xf32>
    %8 = vector.broadcast %7 : vector<1x512xf32> to vector<16x512xf32>
    %9 = arith.addf %6, %8 : vector<16x512xf32>
    %10 = vector.shape_cast %9 : vector<16x512xf32> to vector<2x8x512xf32>
    %c0_7 = arith.constant 0 : index
    %c0_8 = arith.constant 0 : index
    %c0_9 = arith.constant 0 : index
    %11 = vector.load %arg9[%c0_7, %c0_8, %c0_9] : memref<2x8x512xf32, #tpu.memory_space<vmem>>, vector<2x8x512xf32>
    tpu.vector_store %arg9[%c0_7, %c0_8, %c0_9], %10 {strides = array<i32>} : memref<2x8x512xf32, #tpu.memory_space<vmem>>, vector<2x8x512xf32>,
    %c0_10 = arith.constant 0 : index
    %c0_11 = arith.constant 0 : index
    %12 = vector.load %arg5[%c0_10, %c0_11] : memref<128x512xf32, #tpu.memory_space<vmem>>, vector<128x512xf32>
    %c0_12 = arith.constant 0 : index
    %c0_13 = arith.constant 0 : index
    %13 = vector.load %arg10[%c0_12, %c0_13] : memref<8x128xf32, #tpu.memory_space<vmem>>, vector<8x128xf32>
    %c0_14 = arith.constant 0 : index
    %c0_15 = arith.constant 0 : index
    %14 = vector.load %arg11[%c0_14, %c0_15] : memref<8x128xf32, #tpu.memory_space<vmem>>, vector<8x128xf32>
    %c0_i32_16 = arith.constant 0 : i32
    %15 = arith.index_cast %c0_i32_16 : i32 to index
    %c0_17 = arith.constant 0 : index
    %c0_18 = arith.constant 0 : index
    %16 = vector.load %arg9[%15, %c0_17, %c0_18] : memref<2x8x512xf32, #tpu.memory_space<vmem>>, vector<1x8x512xf32>
    %17 = vector.shape_cast %16 : vector<1x8x512xf32> to vector<8x512xf32>
    %cst_19 = arith.constant dense<0.000000e+00> : vector<8x512xf32>
    %18 = tpu.matmul %13, %12, %cst_19 {dimension_numbers = #tpu.dot_dimension_numbers<[1], [0], [0], [1], [0, 0, 1, 1], [], []>} : vector<8x128xf32>, vector<128x512xf32>, vector<8x512xf32> -> vector<8x512xf32>
    %19 = arith.addf %17, %18 : vector<8x512xf32>
    %20 = vector.extract_strided_slice %19 {offsets = [0, 0], sizes = [8, 128], strides = [1, 1]} : vector<8x512xf32> to vector<8x128xf32>
    %21 = arith.negf %20 : vector<8x128xf32>
    %22 = math.exp %21 : vector<8x128xf32>
    %cst_20 = arith.constant 1.000000e+00 : f32
    %23 = vector.broadcast %cst_20 : f32 to vector<8x128xf32>
    %24 = arith.addf %23, %22 : vector<8x128xf32>
    %25 = arith.divf %23, %24 : vector<8x128xf32>
    %26 = vector.extract_strided_slice %19 {offsets = [0, 128], sizes = [8, 128], strides = [1, 1]} : vector<8x512xf32> to vector<8x128xf32>
    %27 = arith.negf %26 : vector<8x128xf32>
    %28 = math.exp %27 : vector<8x128xf32>
    %cst_21 = arith.constant 1.000000e+00 : f32
    %29 = vector.broadcast %cst_21 : f32 to vector<8x128xf32>
    %30 = arith.addf %29, %28 : vector<8x128xf32>
    %31 = arith.divf %29, %30 : vector<8x128xf32>
    %32 = vector.extract_strided_slice %19 {offsets = [0, 256], sizes = [8, 128], strides = [1, 1]} : vector<8x512xf32> to vector<8x128xf32>
    %33 = math.tanh %32 : vector<8x128xf32>
    %34 = vector.extract_strided_slice %19 {offsets = [0, 384], sizes = [8, 128], strides = [1, 1]} : vector<8x512xf32> to vector<8x128xf32>
    %35 = arith.negf %34 : vector<8x128xf32>
    %36 = math.exp %35 : vector<8x128xf32>
    %cst_22 = arith.constant 1.000000e+00 : f32
    %37 = vector.broadcast %cst_22 : f32 to vector<8x128xf32>
    %38 = arith.addf %37, %36 : vector<8x128xf32>
    %39 = arith.divf %37, %38 : vector<8x128xf32>
    %40 = arith.mulf %31, %14 : vector<8x128xf32>
    %41 = arith.mulf %25, %33 : vector<8x128xf32>
    %42 = arith.addf %40, %41 : vector<8x128xf32>
    %43 = math.tanh %42 : vector<8x128xf32>
    %44 = arith.mulf %39, %43 : vector<8x128xf32>
    %c1_i32 = arith.constant 1 : i32
    %45 = arith.index_cast %c1_i32 : i32 to index
    %c0_23 = arith.constant 0 : index
    %c0_24 = arith.constant 0 : index
    %46 = vector.load %arg9[%45, %c0_23, %c0_24] : memref<2x8x512xf32, #tpu.memory_space<vmem>>, vector<1x8x512xf32>
    %47 = vector.shape_cast %46 : vector<1x8x512xf32> to vector<8x512xf32>
    %cst_25 = arith.constant dense<0.000000e+00> : vector<8x512xf32>
    %48 = tpu.matmul %44, %12, %cst_25 {dimension_numbers = #tpu.dot_dimension_numbers<[1], [0], [0], [1], [0, 0, 1, 1], [], []>} : vector<8x128xf32>, vector<128x512xf32>, vector<8x512xf32> -> vector<8x512xf32>
    %49 = arith.addf %47, %48 : vector<8x512xf32>
    %50 = vector.extract_strided_slice %49 {offsets = [0, 0], sizes = [8, 128], strides = [1, 1]} : vector<8x512xf32> to vector<8x128xf32>
    %51 = arith.negf %50 : vector<8x128xf32>
    %52 = math.exp %51 : vector<8x128xf32>
    %cst_26 = arith.constant 1.000000e+00 : f32
    %53 = vector.broadcast %cst_26 : f32 to vector<8x128xf32>
    %54 = arith.addf %53, %52 : vector<8x128xf32>
    %55 = arith.divf %53, %54 : vector<8x128xf32>
    %56 = vector.extract_strided_slice %49 {offsets = [0, 128], sizes = [8, 128], strides = [1, 1]} : vector<8x512xf32> to vector<8x128xf32>
    %57 = arith.negf %56 : vector<8x128xf32>
    %58 = math.exp %57 : vector<8x128xf32>
    %cst_27 = arith.constant 1.000000e+00 : f32
    %59 = vector.broadcast %cst_27 : f32 to vector<8x128xf32>
    %60 = arith.addf %59, %58 : vector<8x128xf32>
    %61 = arith.divf %59, %60 : vector<8x128xf32>
    %62 = vector.extract_strided_slice %49 {offsets = [0, 256], sizes = [8, 128], strides = [1, 1]} : vector<8x512xf32> to vector<8x128xf32>
    %63 = math.tanh %62 : vector<8x128xf32>
    %64 = vector.extract_strided_slice %49 {offsets = [0, 384], sizes = [8, 128], strides = [1, 1]} : vector<8x512xf32> to vector<8x128xf32>
    %65 = arith.negf %64 : vector<8x128xf32>
    %66 = math.exp %65 : vector<8x128xf32>
    %cst_28 = arith.constant 1.000000e+00 : f32
    %67 = vector.broadcast %cst_28 : f32 to vector<8x128xf32>
    %68 = arith.addf %67, %66 : vector<8x128xf32>
    %69 = arith.divf %67, %68 : vector<8x128xf32>
    %70 = arith.mulf %61, %42 : vector<8x128xf32>
    %71 = arith.mulf %55, %63 : vector<8x128xf32>
    %72 = arith.addf %70, %71 : vector<8x128xf32>
    %73 = math.tanh %72 : vector<8x128xf32>
    %74 = arith.mulf %69, %73 : vector<8x128xf32>
    %c2_i32 = arith.constant 2 : i32
    %c0_29 = arith.constant 0 : index
    %c0_30 = arith.constant 0 : index
    %75 = vector.load %arg10[%c0_29, %c0_30] : memref<8x128xf32, #tpu.memory_space<vmem>>, vector<8x128xf32>
    tpu.vector_store %arg10[%c0_29, %c0_30], %74 {strides = array<i32>} : memref<8x128xf32, #tpu.memory_space<vmem>>, vector<8x128xf32>,
    %c0_31 = arith.constant 0 : index
    %c0_32 = arith.constant 0 : index
    %76 = vector.load %arg11[%c0_31, %c0_32] : memref<8x128xf32, #tpu.memory_space<vmem>>, vector<8x128xf32>
    tpu.vector_store %arg11[%c0_31, %c0_32], %72 {strides = array<i32>} : memref<8x128xf32, #tpu.memory_space<vmem>>, vector<8x128xf32>,
    %c3_i32 = arith.constant 3 : i32
    %77 = arith.cmpi eq, %arg1, %c3_i32 : i32
    %78 = arith.extui %77 : i1 to i32
    %c0_i32_33 = arith.constant 0 : i32
    %79 = arith.cmpi ne, %78, %c0_i32_33 : i32
    scf.if %79 {
      %c0_34 = arith.constant 0 : index
      %c0_35 = arith.constant 0 : index
      %80 = vector.load %arg6[%c0_34, %c0_35] : memref<128x4xf32, #tpu.memory_space<vmem>>, vector<128x4xf32>
      %cst_36 = arith.constant dense<0.000000e+00> : vector<8x4xf32>
      %81 = tpu.matmul %74, %80, %cst_36 {dimension_numbers = #tpu.dot_dimension_numbers<[1], [0], [0], [1], [0, 0, 1, 1], [], []>} : vector<8x128xf32>, vector<128x4xf32>, vector<8x4xf32> -> vector<8x4xf32>
      %c0_37 = arith.constant 0 : index
      %c0_38 = arith.constant 0 : index
      %82 = vector.load %arg7[%c0_37, %c0_38] : memref<1x4xf32, #tpu.memory_space<vmem>>, vector<1x4xf32>
      %83 = vector.broadcast %82 : vector<1x4xf32> to vector<8x4xf32>
      %84 = arith.addf %81, %83 : vector<8x4xf32>
      %c0_39 = arith.constant 0 : index
      %c0_40 = arith.constant 0 : index
      %85 = vector.load %arg8[%c0_39, %c0_40] : memref<8x4xf32, #tpu.memory_space<vmem>>, vector<8x4xf32>
      tpu.vector_store %arg8[%c0_39, %c0_40], %84 {strides = array<i32>} : memref<8x4xf32, #tpu.memory_space<vmem>>, vector<8x4xf32>,
    } else {
    }
    return
  }
  func.func @transform_0(%arg0: i32, %arg1: i32) -> (i32, i32, i32) {
    %c0_i32 = arith.constant 0 : i32
    %c0_i32_0 = arith.constant 0 : i32
    return %arg1, %arg0, %c0_i32 : i32, i32, i32
  }
  func.func @transform_1(%arg0: i32, %arg1: i32) -> (i32, i32) {
    %c0_i32 = arith.constant 0 : i32
    %c0_i32_0 = arith.constant 0 : i32
    %c0_i32_1 = arith.constant 0 : i32
    return %c0_i32, %c0_i32_0 : i32, i32
  }
  func.func @transform_2(%arg0: i32, %arg1: i32) -> (i32, i32) {
    %c0_i32 = arith.constant 0 : i32
    %c0_i32_0 = arith.constant 0 : i32
    %c0_i32_1 = arith.constant 0 : i32
    return %c0_i32, %c0_i32_0 : i32, i32
  }
  func.func @transform_3(%arg0: i32, %arg1: i32) -> (i32, i32) {
    %c0_i32 = arith.constant 0 : i32
    %c0_i32_0 = arith.constant 0 : i32
    %c0_i32_1 = arith.constant 0 : i32
    return %c0_i32, %c0_i32_0 : i32, i32
  }
  func.func @transform_4(%arg0: i32, %arg1: i32) -> (i32, i32) {
    %c0_i32 = arith.constant 0 : i32
    %c0_i32_0 = arith.constant 0 : i32
    %c0_i32_1 = arith.constant 0 : i32
    return %c0_i32, %c0_i32_0 : i32, i32
  }
  func.func @transform_5(%arg0: i32, %arg1: i32) -> (i32, i32) {
    %c0_i32 = arith.constant 0 : i32
    %c0_i32_0 = arith.constant 0 : i32
    %c0_i32_1 = arith.constant 0 : i32
    return %c0_i32, %c0_i32_0 : i32, i32
  }
  func.func @transform_6(%arg0: i32, %arg1: i32) -> (i32, i32) {
    %c0_i32 = arith.constant 0 : i32
    %c0_i32_0 = arith.constant 0 : i32
    return %arg0, %c0_i32 : i32, i32
  }
}

</mosaic_0001>

<llo_original>
// kernel: lstm_classifier_forward.2
$region0: #{lstm_classifier_forward.2}
  #allocation0 [shape = 'u32[]', space=smem, size = 0x4, offset = 0x4, fixed_abs, tag = 'smem constant byte address 0x4 - core index']
  #allocation1 [shape = 'u32[72,128]{1,0:T(1,128)}', space=vmem, size = 0x9000, scoped, tag = 'internal scratch']
  #allocation2 [shape = 'f32[2,8,512]{2,1,0:T(8,128)}', space=vmem, size = 0x8000, scoped, tag = 'scratch operand']
  #allocation3 [shape = 'f32[8,128]{1,0:T(8,128)}', space=vmem, size = 0x1000, scoped, tag = 'scratch operand']
  #allocation4 [shape = 'f32[8,128]{1,0:T(8,128)}', space=vmem, size = 0x1000, scoped, tag = 'scratch operand']
  %s0 = inlined_call_operand.vmem [shape: f32[8,8,16], index: 0, kind: input, shape index: {}]
  %s1 = inlined_call_operand.vmem [shape: f32[16,512], index: 1, kind: input, shape index: {}]
  %s2 = inlined_call_operand.vmem [shape: f32[1,512], index: 2, kind: input, shape index: {}]
  %s3 = inlined_call_operand.hbm [shape: f32[128,512], index: 3, kind: input, shape index: {}]
  %s4 = inlined_call_operand.vmem [shape: f32[8,8,128], index: 4, kind: output, shape index: {}]
  %s5 = sld [smem:[#allocation0]]
  $region57: #{lstm_classifier_forward.2} parent=0
    _
  %s7 = ssub.s32 1, %s5
  %s8 = scalar_select 0, %s7, %s5
  $region1: #{lstm_classifier_forward.2} parent=0
    #allocation5 [shape = 'u8[262144]{0}', space=vmem, size = 0x40000, scoped, tag = 'input window, operand 3, single buffered']
    #allocation6 [shape = 's32[2]{0}', space=sflag, size = 0x8, scoped, tag = 'scoped memory for lstm_classifier_forward.2']
    %9 = vsyncpa [#allocation6], 0
    loop: start=0, step=1, limit=6
    $region2: #{lstm_classifier_forward.2} parent=1 // loop_pre_header
      _
    $region3: #{lstm_classifier_forward.2} parent=1 // loop_header
      %s11 = sphi 0, %s15
      %p12 = scmp.ge.s32.totalorder %s11, 6
      %s18 = sphi 0, %s30
      %s19 = sphi 0, %s26
      %s20 = sphi 0, %s18
      %s21 = sphi 0, %s19
      %s22 = sphi 0, %s20
      %s23 = sphi 0, %s21
      %s35 = sphi 0, %s37
      %s38 = sphi 0, %s35
      %s39 = sphi 0, %s38
      %s55 = sphi 0, %s39
      %s59 = sphi 0, %s59
      %s61 = sphi 0, %s59
      %s62 = sphi 0, %s61
      %s76 = sphi 0, %s62
      %s80 = sphi 0, %s80
      %s82 = sphi 0, %s80
      %s83 = sphi 0, %s82
      %s97 = sphi 0, %s83
      %s101 = sphi 0, %s101
      %s103 = sphi 0, %s101
      %s104 = sphi 0, %s103
      %s118 = sphi 0, %s104
      %s126 = sphi 0, %s128
      %s129 = sphi 0, %s126
      %s130 = sphi 0, %s129
      %s146 = sphi 0, %s130
    $region4: #{lstm_classifier_forward.2} parent=1 // loop_header_branch
      %14 = sbr.rel (%p12) target = $region8
    $region5: #{lstm_classifier_forward.2} parent=1 // loop_body
      %s16 = ssub.s32 %s11, 1
      %s17 = ssub.s32 %s11, 2
      %s24 = sadd.s32 1, %s19
      %p25 = scmp.ge.s32.totalorder %s24, 4
      %s26 = scalar_select %p25, 0, %s24
      %s27 = sadd.s32 1, %s18
      %s28 = scalar_select %p25, %s27, %s18
      %p29 = scmp.ge.s32.totalorder %s28, 1
      %s30 = scalar_select %p29, 0, %s28
      %s31 = ssub.s32 %s19, %s26
      %s32 = ssub.s32 %s18, %s30
      %s33 = sor.u32 %s31, %s32
      %p34 = scmp.eq.s32.totalorder %s33, 0
      %s36 = sadd.s32 %s35, 1
      %s37 = scalar_select %p34, %s35, %s36
      %p40 = pneg %p34
      %p41 = scmp.eq.s32.totalorder %s11, 3
      %p42 = por %p40, %p41
      %p43 = scmp.ne.s32.totalorder %s35, %s38
      %p44 = scmp.eq.s32.totalorder %s11, 0
      %p45 = por %p43, %p44
      %p46 = scmp.ne.s32.totalorder %s35, %s38
      %p47 = scmp.eq.s32.totalorder %s16, 3
      %p48 = por %p46, %p47
      %p49 = scmp.ne.s32.totalorder %s38, %s39
      %p50 = scmp.eq.s32.totalorder %s16, 0
      %p51 = por %p49, %p50
      %p52 = scmp.ne.s32.totalorder %s38, %s39
      %p53 = scmp.eq.s32.totalorder %s17, 3
      %p54 = por %p52, %p53
      %p56 = scmp.ne.s32.totalorder %s39, %s55
      %p57 = scmp.eq.s32.totalorder %s17, 0
      %p58 = por %p56, %p57
      %s60 = sadd.s32 %s59, 1
      %p63 = scmp.eq.s32.totalorder %s11, 3
      %p64 = scmp.ne.s32.totalorder %s59, %s61
      %p65 = scmp.eq.s32.totalorder %s11, 0
      %p66 = por %p64, %p65
      %p67 = scmp.ne.s32.totalorder %s59, %s61
      %p68 = scmp.eq.s32.totalorder %s16, 3
      %p69 = por %p67, %p68
      %p70 = scmp.ne.s32.totalorder %s61, %s62
      %p71 = scmp.eq.s32.totalorder %s16, 0
      %p72 = por %p70, %p71
      %p73 = scmp.ne.s32.totalorder %s61, %s62
      %p74 = scmp.eq.s32.totalorder %s17, 3
      %p75 = por %p73, %p74
      %p77 = scmp.ne.s32.totalorder %s62, %s76
      %p78 = scmp.eq.s32.totalorder %s17, 0
      %p79 = por %p77, %p78
      %s81 = sadd.s32 %s80, 1
      %p84 = scmp.eq.s32.totalorder %s11, 3
      %p85 = scmp.ne.s32.totalorder %s80, %s82
      %p86 = scmp.eq.s32.totalorder %s11, 0
      %p87 = por %p85, %p86
      %p88 = scmp.ne.s32.totalorder %s80, %s82
      %p89 = scmp.eq.s32.totalorder %s16, 3
      %p90 = por %p88, %p89
      %p91 = scmp.ne.s32.totalorder %s82, %s83
      %p92 = scmp.eq.s32.totalorder %s16, 0
      %p93 = por %p91, %p92
      %p94 = scmp.ne.s32.totalorder %s82, %s83
      %p95 = scmp.eq.s32.totalorder %s17, 3
      %p96 = por %p94, %p95
      %p98 = scmp.ne.s32.totalorder %s83, %s97
      %p99 = scmp.eq.s32.totalorder %s17, 0
      %p100 = por %p98, %p99
      %s102 = sadd.s32 %s101, 1
      %p105 = scmp.eq.s32.totalorder %s11, 3
      %p106 = scmp.ne.s32.totalorder %s101, %s103
      %p107 = scmp.eq.s32.totalorder %s11, 0
      %p108 = por %p106, %p107
      %p109 = scmp.ne.s32.totalorder %s101, %s103
      %p110 = scmp.eq.s32.totalorder %s16, 3
      %p111 = por %p109, %p110
      %p112 = scmp.ne.s32.totalorder %s103, %s104
      %p113 = scmp.eq.s32.totalorder %s16, 0
      %p114 = por %p112, %p113
      %p115 = scmp.ne.s32.totalorder %s103, %s104
      %p116 = scmp.eq.s32.totalorder %s17, 3
      %p117 = por %p115, %p116
      %p119 = scmp.ne.s32.totalorder %s104, %s118
      %p120 = scmp.eq.s32.totalorder %s17, 0
      %p121 = por %p119, %p120
      %s122 = ssub.s32 %s19, %s26
      %s123 = ssub.s32 %s18, %s30
      %s124 = sor.u32 %s122, %s123
      %p125 = scmp.eq.s32.totalorder %s124, 0
      %s127 = sadd.s32 %s126, 1
      %s128 = scalar_select %p125, %s126, %s127
      %p131 = pneg %p125
      %p132 = scmp.eq.s32.totalorder %s11, 3
      %p133 = por %p131, %p132
      %p134 = scmp.ne.s32.totalorder %s126, %s129
      %p135 = scmp.eq.s32.totalorder %s11, 0
      %p136 = por %p134, %p135
      %p137 = scmp.ne.s32.totalorder %s126, %s129
      %p138 = scmp.eq.s32.totalorder %s16, 3
      %p139 = por %p137, %p138
      %p140 = scmp.ne.s32.totalorder %s129, %s130
      %p141 = scmp.eq.s32.totalorder %s16, 0
      %p142 = por %p140, %p141
      %p143 = scmp.ne.s32.totalorder %s129, %s130
      %p144 = scmp.eq.s32.totalorder %s17, 3
      %p145 = por %p143, %p144
      %p147 = scmp.ne.s32.totalorder %s130, %s146
      %p148 = scmp.eq.s32.totalorder %s17, 0
      %p149 = por %p147, %p148
      %p150 = scmp.le.s32.totalorder 1, %s11
      %p151 = scmp.lt.s32.totalorder %s11, 5
      %p152 = pnand %p150, %p151
      %p153 = pneg %p152
      // Predicated region
      $region9: #{lstm_classifier_forward.2} parent=5 // pred_check
        _
      $region10: #{lstm_classifier_forward.2} parent=5 // pred_check_branch
        %155 = sbr.rel (%p152) target = $region12
      $region11: #{lstm_classifier_forward.2} parent=5 // pred_region
        %s156 = ssub.s32 %s11, 1
        // Predicated region
        $region13: #{lstm_classifier_forward.2} parent=11 // pred_check
          %p157 = pneg %p72
        $region14: #{lstm_classifier_forward.2} parent=11 // pred_check_branch
          %159 = sbr.rel (%p157) target = $region16
        $region15: #{lstm_classifier_forward.2} parent=11 // pred_region
          _
        $region16: #{lstm_classifier_forward.2} parent=11 // pred_fallthru
          _
        // Predicated region
        $region17: #{lstm_classifier_forward.2} parent=11 // pred_check
          %p160 = pneg %p93
        $region18: #{lstm_classifier_forward.2} parent=11 // pred_check_branch
          %162 = sbr.rel (%p160) target = $region20
        $region19: #{lstm_classifier_forward.2} parent=11 // pred_region
          _
        $region20: #{lstm_classifier_forward.2} parent=11 // pred_fallthru
          _
        // Predicated region
        $region21: #{lstm_classifier_forward.2} parent=11 // pred_check
          %p163 = pneg %p114
        $region22: #{lstm_classifier_forward.2} parent=11 // pred_check_branch
          %165 = sbr.rel (%p163) target = $region24
        $region23: #{lstm_classifier_forward.2} parent=11 // pred_region
          %167 = vsyncadd [#allocation6], 0
          %s168 = sshll.u32 %s3, 4
          %s169 = int_to_ptr.hbm [resolvable:$true] %s168
          %s170 = sshll.u32 [#allocation5], 4
          %s171 = int_to_ptr.vmem [resolvable:$true] %s170
          %176 = dma.hbm_to_vmem [thread:$0]  %s169, 8192, %s171, [#allocation6], 512, 512, 32
        $region24: #{lstm_classifier_forward.2} parent=11 // pred_fallthru
          _
      $region12: #{lstm_classifier_forward.2} parent=5 // pred_fallthru
        _
      %p177 = scmp.lt.s32.totalorder %s11, 4
      // Predicated region
      $region25: #{lstm_classifier_forward.2} parent=5 // pred_check
        %p178 = pneg %p177
      $region26: #{lstm_classifier_forward.2} parent=5 // pred_check_branch
        %180 = sbr.rel (%p178) target = $region28
      $region27: #{lstm_classifier_forward.2} parent=5 // pred_region
        // Predicated region
        $region29: #{lstm_classifier_forward.2} parent=27 // pred_check
          %p181 = pneg %p45
        $region30: #{lstm_classifier_forward.2} parent=27 // pred_check_branch
          %183 = sbr.rel (%p181) target = $region32
        $region31: #{lstm_classifier_forward.2} parent=27 // pred_region
          %s184 = smul.u32 2, %s19
          %p185 = scmp.lt.s32.totalorder %s184, 7
          %s186 = scalar_select %p185, %s184, 7
          %p187 = scmp.lt.s32.totalorder %s18, 0
          %s188 = scalar_select %p187, %s18, 0
          %s189 = sadd.s32 %s188, %s186
          %s190 = smul.addr %s189, 8
          %s191 = scalar_lea.vmem %s0, %s190
          %s192 = smul.u32 2, %s19
        $region32: #{lstm_classifier_forward.2} parent=27 // pred_fallthru
          _
      $region28: #{lstm_classifier_forward.2} parent=5 // pred_fallthru
        _
      %p193 = scmp.le.s32.totalorder 1, %s11
      %p194 = scmp.lt.s32.totalorder %s11, 5
      %p195 = pnand %p193, %p194
      %p196 = pneg %p195
      // Predicated region
      $region33: #{lstm_classifier_forward.2} parent=5 // pred_check
        _
      $region34: #{lstm_classifier_forward.2} parent=5 // pred_check_branch
        %198 = sbr.rel (%p195) target = $region36
      $region35: #{lstm_classifier_forward.2} parent=5 // pred_region
        %s199 = ssub.s32 %s11, 1
        // Predicated region
        $region37: #{lstm_classifier_forward.2} parent=35 // pred_check
          %p200 = pneg %p114
        $region38: #{lstm_classifier_forward.2} parent=35 // pred_check_branch
          %202 = sbr.rel (%p200) target = $region40
        $region39: #{lstm_classifier_forward.2} parent=35 // pred_region
          %204 = dma.done [#allocation6], 8192
        $region40: #{lstm_classifier_forward.2} parent=35 // pred_fallthru
          _
        %s205 = smul.u32 2, %s21
        %p206 = scmp.lt.s32.totalorder %s205, 7
        %s207 = scalar_select %p206, %s205, 7
        %p208 = scmp.lt.s32.totalorder %s20, 0
        %s209 = scalar_select %p208, %s20, 0
        %s210 = sadd.s32 %s209, %s207
        %s211 = smul.addr %s210, 8
        %s212 = scalar_lea.vmem %s0, %s211
        %p213 = pneg %p51
        %p214 = pneg %p48
        %p215 = pneg %p72
        %p216 = pneg %p69
        %p217 = pneg %p93
        %p218 = pneg %p90
        %p219 = pneg %p114
        %p220 = pneg %p111
        %p221 = pneg %p142
        %p222 = pneg %p139
        %s223 = smul.u32 2, %s21
        %p224 = scmp.lt.s32.totalorder %s223, 7
        %s225 = scalar_select %p224, %s223, 7
        %p226 = scmp.lt.s32.totalorder %s20, 0
        %s227 = scalar_select %p226, %s20, 0
        %s228 = sadd.s32 %s227, %s225
        %s229 = smul.addr %s228, 8
        %s230 = scalar_lea.vmem %s4, %s229
        %s231 = smul.u32 2, %s21
        %p232 = scmp.lt.s32.totalorder %s231, 7
        %s233 = scalar_select %p232, %s231, 7
        %p234 = scmp.lt.s32.totalorder %s20, 0
        %s235 = scalar_select %p234, %s20, 0
        %s236 = sadd.s32 %s235, %s233
        %s237 = smul.addr %s236, 8
        %s238 = scalar_lea.vmem %s0, %s237
        %s239 = smul.u32 2, %s21
        %s240 = smul.u32 2, %s21
        %p241 = scmp.lt.s32.totalorder %s240, 7
        %s242 = scalar_select %p241, %s240, 7
        %p243 = scmp.lt.s32.totalorder %s20, 0
        %s244 = scalar_select %p243, %s20, 0
        %s245 = sadd.s32 %s244, %s242
        %s246 = smul.addr %s245, 8
        %s247 = scalar_lea.vmem %s4, %s246
        %s248 = smul.u32 2, %s21
        %p249 = scmp.eq.s32.totalorder %s21, 0
        // Predicated region
        $region41: #{lstm_classifier_forward.2} parent=35 // pred_check
          %p250 = pneg %p249
        $region42: #{lstm_classifier_forward.2} parent=35 // pred_check_branch
          %252 = sbr.rel (%p250) target = $region44
        $region43: #{lstm_classifier_forward.2} parent=35 // pred_region
          %253 = vst [vmem:[#allocation3] sm:$0xff] 0.0
          %254 = vst [vmem:[#allocation4] sm:$0xff] 0.0
        $region44: #{lstm_classifier_forward.2} parent=35 // pred_fallthru
          _
        %v255 = vld [vmem:[%s238] sm:$0xff]
        %v256 = vld [vmem:[%s238 + $0x8] sm:$0xff]
        %v257 = vld [vmem:[%s1] sm:$0xff]
        %v258 = vld [vmem:[%s1 + $0x8] sm:$0xff]
        %v259 = vld [vmem:[%s1 + $0x10] sm:$0xff]
        %v260 = vld [vmem:[%s1 + $0x18] sm:$0xff]
        %v261 = vld [vmem:[%s1 + $0x20] sm:$0xff]
        %v262 = vld [vmem:[%s1 + $0x28] sm:$0xff]
        %v263 = vld [vmem:[%s1 + $0x30] sm:$0xff]
        %v264 = vld [vmem:[%s1 + $0x38] sm:$0xff]
        %v265 = vld [vmem:[%s2] sm:$0xf]
        %v267 = vperm.slane %v265, 0
        %v268 = vperm.slane %v265, 1
        %v269 = vperm.slane %v265, 2
        %v270 = vperm.slane %v265, 3
        %vm275 = vcmask 130048
        %v277 = vsel %vm275, %v255, 0
        %v280 = vsel %vm275, %v256, 0
        %282 = vmatpush.msra.mxu0 0.0
        %283 = vmatpush.msra.mxu0 0.0
        %284 = vmatpush.msra.mxu0 0.0
        %285 = vmatpush.msra.mxu0 0.0
        %286 = vmatpush.msra.mxu0 0.0
        %287 = vmatpush.msra.mxu0 0.0
        %288 = vmatpush.msra.mxu0 0.0
        %289 = vmatpush.msra.mxu0 0.0
        %290 = vmatpush.msra.mxu0 0.0
        %291 = vmatpush.msra.mxu0 0.0
        %292 = vmatpush.msra.mxu0 0.0
        %293 = vmatpush.msra.mxu0 0.0
        %294 = vmatpush.msra.mxu0 0.0
        %295 = vmatpush.msra.mxu0 0.0
        %296 = vmatpush.msra.mxu0 %v261
        %297 = vmatpush.msra.mxu0 %v257
        %298 = vmatmul.f32.gmra.mxu0 %v277
        %v299 = vpop.f32.mrf.mxu0
        %v300 = vadd.f32 %v267, %v299
        %301 = vmatmul.f32.gmra.mxu0 %v280
        %v302 = vpop.f32.mrf.mxu0
        %v303 = vadd.f32 %v267, %v302
        %304 = vdwg.mxu0
        %305 = vmatpush.msra.mxu0 0.0
        %306 = vmatpush.msra.mxu0 0.0
        %307 = vmatpush.msra.mxu0 0.0
        %308 = vmatpush.msra.mxu0 0.0
        %309 = vmatpush.msra.mxu0 0.0
        %310 = vmatpush.msra.mxu0 0.0
        %311 = vmatpush.msra.mxu0 0.0
        %312 = vmatpush.msra.mxu0 0.0
        %313 = vmatpush.msra.mxu0 0.0
        %314 = vmatpush.msra.mxu0 0.0
        %315 = vmatpush.msra.mxu0 0.0
        %316 = vmatpush.msra.mxu0 0.0
        %317 = vmatpush.msra.mxu0 0.0
        %318 = vmatpush.msra.mxu0 0.0
        %319 = vmatpush.msra.mxu0 %v262
        %320 = vmatpush.msra.mxu0 %v258
        %321 = vmatmul.f32.gmra.mxu0 %v277
        %v322 = vpop.f32.mrf.mxu0
        %v323 = vadd.f32 %v268, %v322
        %324 = vmatmul.f32.gmra.mxu0 %v280
        %v325 = vpop.f32.mrf.mxu0
        %v326 = vadd.f32 %v268, %v325
        %327 = vdwg.mxu0
        %328 = vmatpush.msra.mxu0 0.0
        %329 = vmatpush.msra.mxu0 0.0
        %330 = vmatpush.msra.mxu0 0.0
        %331 = vmatpush.msra.mxu0 0.0
        %332 = vmatpush.msra.mxu0 0.0
        %333 = vmatpush.msra.mxu0 0.0
        %334 = vmatpush.msra.mxu0 0.0
        %335 = vmatpush.msra.mxu0 0.0
        %336 = vmatpush.msra.mxu0 0.0
        %337 = vmatpush.msra.mxu0 0.0
        %338 = vmatpush.msra.mxu0 0.0
        %339 = vmatpush.msra.mxu0 0.0
        %340 = vmatpush.msra.mxu0 0.0
        %341 = vmatpush.msra.mxu0 0.0
        %342 = vmatpush.msra.mxu0 %v263
        %343 = vmatpush.msra.mxu0 %v259
        %344 = vmatmul.f32.gmra.mxu0 %v277
        %v345 = vpop.f32.mrf.mxu0
        %v346 = vadd.f32 %v269, %v345
        %347 = vmatmul.f32.gmra.mxu0 %v280
        %v348 = vpop.f32.mrf.mxu0
        %v349 = vadd.f32 %v269, %v348
        %350 = vdwg.mxu0
        %351 = vmatpush.msra.mxu0 0.0
        %352 = vmatpush.msra.mxu0 0.0
        %353 = vmatpush.msra.mxu0 0.0
        %354 = vmatpush.msra.mxu0 0.0
        %355 = vmatpush.msra.mxu0 0.0
        %356 = vmatpush.msra.mxu0 0.0
        %357 = vmatpush.msra.mxu0 0.0
        %358 = vmatpush.msra.mxu0 0.0
        %359 = vmatpush.msra.mxu0 0.0
        %360 = vmatpush.msra.mxu0 0.0
        %361 = vmatpush.msra.mxu0 0.0
        %362 = vmatpush.msra.mxu0 0.0
        %363 = vmatpush.msra.mxu0 0.0
        %364 = vmatpush.msra.mxu0 0.0
        %365 = vmatpush.msra.mxu0 %v264
        %366 = vmatpush.msra.mxu0 %v260
        %367 = vmatmul.f32.gmra.mxu0 %v277
        %v368 = vpop.f32.mrf.mxu0
        %v369 = vadd.f32 %v270, %v368
        %370 = vmatmul.f32.gmra.mxu0 %v280
        %v371 = vpop.f32.mrf.mxu0
        %v372 = vadd.f32 %v270, %v371
        %373 = vdwg.mxu0
        %374 = vst [vmem:[#allocation2] sm:$0xff] %v300
        %375 = vst [vmem:[#allocation2 + $0x8] sm:$0xff] %v323
        %376 = vst [vmem:[#allocation2 + $0x10] sm:$0xff] %v346
        %377 = vst [vmem:[#allocation2 + $0x18] sm:$0xff] %v369
        %378 = vst [vmem:[#allocation2 + $0x20] sm:$0xff] %v303
        %379 = vst [vmem:[#allocation2 + $0x28] sm:$0xff] %v326
        %380 = vst [vmem:[#allocation2 + $0x30] sm:$0xff] %v349
        %381 = vst [vmem:[#allocation2 + $0x38] sm:$0xff] %v372
        %v382 = vld [vmem:[#allocation5] sm:$0xff]
        %v383 = vld [vmem:[#allocation5 + $0x8] sm:$0xff]
        %v384 = vld [vmem:[#allocation5 + $0x10] sm:$0xff]
        %v385 = vld [vmem:[#allocation5 + $0x18] sm:$0xff]
        %v386 = vld [vmem:[#allocation5 + $0x20] sm:$0xff]
        %v387 = vld [vmem:[#allocation5 + $0x28] sm:$0xff]
        %v388 = vld [vmem:[#allocation5 + $0x30] sm:$0xff]
        %v389 = vld [vmem:[#allocation5 + $0x38] sm:$0xff]
        %v390 = vld [vmem:[#allocation5 + $0x40] sm:$0xff]
        %v391 = vld [vmem:[#allocation5 + $0x48] sm:$0xff]
        %v392 = vld [vmem:[#allocation5 + $0x50] sm:$0xff]
        %v393 = vld [vmem:[#allocation5 + $0x58] sm:$0xff]
        %v394 = vld [vmem:[#allocation5 + $0x60] sm:$0xff]
        %v395 = vld [vmem:[#allocation5 + $0x68] sm:$0xff]
        %v396 = vld [vmem:[#allocation5 + $0x70] sm:$0xff]
        %v397 = vld [vmem:[#allocation5 + $0x78] sm:$0xff]
        %v398 = vld [vmem:[#allocation5 + $0x80] sm:$0xff]
        %v399 = vld [vmem:[#allocation5 + $0x88] sm:$0xff]
        %v400 = vld [vmem:[#allocation5 + $0x90] sm:$0xff]
        %v401 = vld [vmem:[#allocation5 + $0x98] sm:$0xff]
        %v402 = vld [vmem:[#allocation5 + $0xa0] sm:$0xff]
        %v403 = vld [vmem:[#allocation5 + $0xa8] sm:$0xff]
        %v404 = vld [vmem:[#allocation5 + $0xb0] sm:$0xff]
        %v405 = vld [vmem:[#allocation5 + $0xb8] sm:$0xff]
        %v406 = vld [vmem:[#allocation5 + $0xc0] sm:$0xff]
        %v407 = vld [vmem:[#allocation5 + $0xc8] sm:$0xff]
        %v408 = vld [vmem:[#allocation5 + $0xd0] sm:$0xff]
        %v409 = vld [vmem:[#allocation5 + $0xd8] sm:$0xff]
        %v410 = vld [vmem:[#allocation5 + $0xe0] sm:$0xff]
        %v411 = vld [vmem:[#allocation5 + $0xe8] sm:$0xff]
        %v412 = vld [vmem:[#allocation5 + $0xf0] sm:$0xff]
        %v413 = vld [vmem:[#allocation5 + $0xf8] sm:$0xff]
        %v414 = vld [vmem:[#allocation5 + $0x100] sm:$0xff]
        %v415 = vld [vmem:[#allocation5 + $0x108] sm:$0xff]
        %v416 = vld [vmem:[#allocation5 + $0x110] sm:$0xff]
        %v417 = vld [vmem:[#allocation5 + $0x118] sm:$0xff]
        %v418 = vld [vmem:[#allocation5 + $0x120] sm:$0xff]
        %v419 = vld [vmem:[#allocation5 + $0x128] sm:$0xff]
        %v420 = vld [vmem:[#allocation5 + $0x130] sm:$0xff]
        %v421 = vld [vmem:[#allocation5 + $0x138] sm:$0xff]
        %v422 = vld [vmem:[#allocation5 + $0x140] sm:$0xff]
        %v423 = vld [vmem:[#allocation5 + $0x148] sm:$0xff]
        %v424 = vld [vmem:[#allocation5 + $0x150] sm:$0xff]
        %v425 = vld [vmem:[#allocation5 + $0x158] sm:$0xff]
        %v426 = vld [vmem:[#allocation5 + $0x160] sm:$0xff]
        %v427 = vld [vmem:[#allocation5 + $0x168] sm:$0xff]
        %v428 = vld [vmem:[#allocation5 + $0x170] sm:$0xff]
        %v429 = vld [vmem:[#allocation5 + $0x178] sm:$0xff]
        %v430 = vld [vmem:[#allocation5 + $0x180] sm:$0xff]
        %v431 = vld [vmem:[#allocation5 + $0x188] sm:$0xff]
        %v432 = vld [vmem:[#allocation5 + $0x190] sm:$0xff]
        %v433 = vld [vmem:[#allocation5 + $0x198] sm:$0xff]
        %v434 = vld [vmem:[#allocation5 + $0x1a0] sm:$0xff]
        %v435 = vld [vmem:[#allocation5 + $0x1a8] sm:$0xff]
        %v436 = vld [vmem:[#allocation5 + $0x1b0] sm:$0xff]
        %v437 = vld [vmem:[#allocation5 + $0x1b8] sm:$0xff]
        %v438 = vld [vmem:[#allocation5 + $0x1c0] sm:$0xff]
        %v439 = vld [vmem:[#allocation5 + $0x1c8] sm:$0xff]
        %v440 = vld [vmem:[#allocation5 + $0x1d0] sm:$0xff]
        %v441 = vld [vmem:[#allocation5 + $0x1d8] sm:$0xff]
        %v442 = vld [vmem:[#allocation5 + $0x1e0] sm:$0xff]
        %v443 = vld [vmem:[#allocation5 + $0x1e8] sm:$0xff]
        %v444 = vld [vmem:[#allocation5 + $0x1f0] sm:$0xff]
        %v445 = vld [vmem:[#allocation5 + $0x1f8] sm:$0xff]
        %v446 = vld [vmem:[#allocation3] sm:$0xff]
        %v447 = vld [vmem:[#allocation4] sm:$0xff]
        %v448 = vld [vmem:[#allocation2] sm:$0xff]
        %v449 = vld [vmem:[#allocation2 + $0x8] sm:$0xff]
        %v450 = vld [vmem:[#allocation2 + $0x10] sm:$0xff]
        %v451 = vld [vmem:[#allocation2 + $0x18] sm:$0xff]
        %452 = vmatpush.msra.mxu0 %v442
        %453 = vmatpush.msra.mxu0 %v438
        %454 = vmatpush.msra.mxu0 %v434
        %455 = vmatpush.msra.mxu0 %v430
        %456 = vmatpush.msra.mxu0 %v426
        %457 = vmatpush.msra.mxu0 %v422
        %458 = vmatpush.msra.mxu0 %v418
        %459 = vmatpush.msra.mxu0 %v414
        %460 = vmatpush.msra.mxu0 %v410
        %461 = vmatpush.msra.mxu0 %v406
        %462 = vmatpush.msra.mxu0 %v402
        %463 = vmatpush.msra.mxu0 %v398
        %464 = vmatpush.msra.mxu0 %v394
        %465 = vmatpush.msra.mxu0 %v390
        %466 = vmatpush.msra.mxu0 %v386
        %467 = vmatpush.msra.mxu0 %v382
        %468 = vmatmul.f32.gmra.mxu0 %v446
        %v469 = vpop.f32.mrf.mxu0
        %v470 = vadd.f32 0.0, %v469
        %471 = vdwg.mxu0
        %472 = vmatpush.msra.mxu0 %v443
        %473 = vmatpush.msra.mxu0 %v439
        %474 = vmatpush.msra.mxu0 %v435
        %475 = vmatpush.msra.mxu0 %v431
        %476 = vmatpush.msra.mxu0 %v427
        %477 = vmatpush.msra.mxu0 %v423
        %478 = vmatpush.msra.mxu0 %v419
        %479 = vmatpush.msra.mxu0 %v415
        %480 = vmatpush.msra.mxu0 %v411
        %481 = vmatpush.msra.mxu0 %v407
        %482 = vmatpush.msra.mxu0 %v403
        %483 = vmatpush.msra.mxu0 %v399
        %484 = vmatpush.msra.mxu0 %v395
        %485 = vmatpush.msra.mxu0 %v391
        %486 = vmatpush.msra.mxu0 %v387
        %487 = vmatpush.msra.mxu0 %v383
        %488 = vmatmul.f32.gmra.mxu0 %v446
        %v489 = vpop.f32.mrf.mxu0
        %v490 = vadd.f32 0.0, %v489
        %491 = vdwg.mxu0
        %492 = vmatpush.msra.mxu0 %v444
        %493 = vmatpush.msra.mxu0 %v440
        %494 = vmatpush.msra.mxu0 %v436
        %495 = vmatpush.msra.mxu0 %v432
        %496 = vmatpush.msra.mxu0 %v428
        %497 = vmatpush.msra.mxu0 %v424
        %498 = vmatpush.msra.mxu0 %v420
        %499 = vmatpush.msra.mxu0 %v416
        %500 = vmatpush.msra.mxu0 %v412
        %501 = vmatpush.msra.mxu0 %v408
        %502 = vmatpush.msra.mxu0 %v404
        %503 = vmatpush.msra.mxu0 %v400
        %504 = vmatpush.msra.mxu0 %v396
        %505 = vmatpush.msra.mxu0 %v392
        %506 = vmatpush.msra.mxu0 %v388
        %507 = vmatpush.msra.mxu0 %v384
        %508 = vmatmul.f32.gmra.mxu0 %v446
        %v509 = vpop.f32.mrf.mxu0
        %v510 = vadd.f32 0.0, %v509
        %511 = vdwg.mxu0
        %512 = vmatpush.msra.mxu0 %v445
        %513 = vmatpush.msra.mxu0 %v441
        %514 = vmatpush.msra.mxu0 %v437
        %515 = vmatpush.msra.mxu0 %v433
        %516 = vmatpush.msra.mxu0 %v429
        %517 = vmatpush.msra.mxu0 %v425
        %518 = vmatpush.msra.mxu0 %v421
        %519 = vmatpush.msra.mxu0 %v417
        %520 = vmatpush.msra.mxu0 %v413
        %521 = vmatpush.msra.mxu0 %v409
        %522 = vmatpush.msra.mxu0 %v405
        %523 = vmatpush.msra.mxu0 %v401
        %524 = vmatpush.msra.mxu0 %v397
        %525 = vmatpush.msra.mxu0 %v393
        %526 = vmatpush.msra.mxu0 %v389
        %527 = vmatpush.msra.mxu0 %v385
        %528 = vmatmul.f32.gmra.mxu0 %v446
        %v529 = vpop.f32.mrf.mxu0
        %v530 = vadd.f32 0.0, %v529
        %531 = vdwg.mxu0
        %v532 = vadd.f32 %v448, %v470
        %v533 = vadd.f32 %v449, %v490
        %v534 = vadd.f32 %v450, %v510
        %v535 = vadd.f32 %v451, %v530
        %v536 = vxor.u32 %v532, 2147483648
        %v537 = vmul.f32 %v536, 1.442695
        %v538 = vpow.pop %v537
        %v539 = vadd.f32 %v538, 1.0
        %v540 = vrcp.pop %v539
        %v541 = vmul.f32 %v539, %v540
        %v542 = vsub.f32 1.0, %v541
        %v543 = vmul.f32 %v540, %v542
        %v544 = vadd.f32 %v540, %v543
        %vm545 = vweird.f32 %v539
        %vm546 = vweird.f32 %v540
        %vm547 = vmor %vm545, %vm546
        %v548 = vsel %vm547, %v540, %v544
        %v549 = vand.u32 2147483647, %v539
        %vm550 = vcmp.eq.f32.partialorder %v549, 8.507059e+37
        %v551 = vand.u32 %v539, 2147483648
        %v552 = vor.u32 1.1754944e-38, %v551
        %v553 = vsel %vm550, %v552, %v548
        %v554 = vmul.f32 1.0, %v553
        %v555 = vxor.u32 %v533, 2147483648
        %v556 = vmul.f32 %v555, 1.442695
        %v557 = vpow.pop %v556
        %v558 = vadd.f32 %v557, 1.0
        %v559 = vrcp.pop %v558
        %v560 = vmul.f32 %v558, %v559
        %v561 = vsub.f32 1.0, %v560
        %v562 = vmul.f32 %v559, %v561
        %v563 = vadd.f32 %v559, %v562
        %vm564 = vweird.f32 %v558
        %vm565 = vweird.f32 %v559
        %vm566 = vmor %vm564, %vm565
        %v567 = vsel %vm566, %v559, %v563
        %v568 = vand.u32 2147483647, %v558
        %vm569 = vcmp.eq.f32.partialorder %v568, 8.507059e+37
        %v570 = vand.u32 %v558, 2147483648
        %v571 = vor.u32 1.1754944e-38, %v570
        %v572 = vsel %vm569, %v571, %v567
        %v573 = vmul.f32 1.0, %v572
        %v574 = vtanh.pop %v534
        %v575 = vxor.u32 %v535, 2147483648
        %v576 = vmul.f32 %v575, 1.442695
        %v577 = vpow.pop %v576
        %v578 = vadd.f32 %v577, 1.0
        %v579 = vrcp.pop %v578
        %v580 = vmul.f32 %v578, %v579
        %v581 = vsub.f32 1.0, %v580
        %v582 = vmul.f32 %v579, %v581
        %v583 = vadd.f32 %v579, %v582
        %vm584 = vweird.f32 %v578
        %vm585 = vweird.f32 %v579
        %vm586 = vmor %vm584, %vm585
        %v587 = vsel %vm586, %v579, %v583
        %v588 = vand.u32 2147483647, %v578
        %vm589 = vcmp.eq.f32.partialorder %v588, 8.507059e+37
        %v590 = vand.u32 %v578, 2147483648
        %v591 = vor.u32 1.1754944e-38, %v590
        %v592 = vsel %vm589, %v591, %v587
        %v593 = vmul.f32 1.0, %v592
        %v594 = vmul.f32 %v573, %v447
        %v595 = vmul.f32 %v554, %v574
        %v596 = vadd.f32 %v594, %v595
        %v597 = vtanh.pop %v596
        %v598 = vmul.f32 %v593, %v597
        %599 = vst [vmem:[%s247] sm:$0xff] %v598
        %s600 = scalar_lea.vmem [#allocation2], 32
        %v601 = vld [vmem:[%s600] sm:$0xff]
        %v602 = vld [vmem:[%s600 + $0x8] sm:$0xff]
        %v603 = vld [vmem:[%s600 + $0x10] sm:$0xff]
        %v604 = vld [vmem:[%s600 + $0x18] sm:$0xff]
        %605 = vmatpush.msra.mxu0 %v442
        %606 = vmatpush.msra.mxu0 %v438
        %607 = vmatpush.msra.mxu0 %v434
        %608 = vmatpush.msra.mxu0 %v430
        %609 = vmatpush.msra.mxu0 %v426
        %610 = vmatpush.msra.mxu0 %v422
        %611 = vmatpush.msra.mxu0 %v418
        %612 = vmatpush.msra.mxu0 %v414
        %613 = vmatpush.msra.mxu0 %v410
        %614 = vmatpush.msra.mxu0 %v406
        %615 = vmatpush.msra.mxu0 %v402
        %616 = vmatpush.msra.mxu0 %v398
        %617 = vmatpush.msra.mxu0 %v394
        %618 = vmatpush.msra.mxu0 %v390
        %619 = vmatpush.msra.mxu0 %v386
        %620 = vmatpush.msra.mxu0 %v382
        %621 = vmatmul.f32.gmra.mxu0 %v598
        %v622 = vpop.f32.mrf.mxu0
        %v623 = vadd.f32 0.0, %v622
        %624 = vdwg.mxu0
        %625 = vmatpush.msra.mxu0 %v443
        %626 = vmatpush.msra.mxu0 %v439
        %627 = vmatpush.msra.mxu0 %v435
        %628 = vmatpush.msra.mxu0 %v431
        %629 = vmatpush.msra.mxu0 %v427
        %630 = vmatpush.msra.mxu0 %v423
        %631 = vmatpush.msra.mxu0 %v419
        %632 = vmatpush.msra.mxu0 %v415
        %633 = vmatpush.msra.mxu0 %v411
        %634 = vmatpush.msra.mxu0 %v407
        %635 = vmatpush.msra.mxu0 %v403
        %636 = vmatpush.msra.mxu0 %v399
        %637 = vmatpush.msra.mxu0 %v395
        %638 = vmatpush.msra.mxu0 %v391
        %639 = vmatpush.msra.mxu0 %v387
        %640 = vmatpush.msra.mxu0 %v383
        %641 = vmatmul.f32.gmra.mxu0 %v598
        %v642 = vpop.f32.mrf.mxu0
        %v643 = vadd.f32 0.0, %v642
        %644 = vdwg.mxu0
        %645 = vmatpush.msra.mxu0 %v444
        %646 = vmatpush.msra.mxu0 %v440
        %647 = vmatpush.msra.mxu0 %v436
        %648 = vmatpush.msra.mxu0 %v432
        %649 = vmatpush.msra.mxu0 %v428
        %650 = vmatpush.msra.mxu0 %v424
        %651 = vmatpush.msra.mxu0 %v420
        %652 = vmatpush.msra.mxu0 %v416
        %653 = vmatpush.msra.mxu0 %v412
        %654 = vmatpush.msra.mxu0 %v408
        %655 = vmatpush.msra.mxu0 %v404
        %656 = vmatpush.msra.mxu0 %v400
        %657 = vmatpush.msra.mxu0 %v396
        %658 = vmatpush.msra.mxu0 %v392
        %659 = vmatpush.msra.mxu0 %v388
        %660 = vmatpush.msra.mxu0 %v384
        %661 = vmatmul.f32.gmra.mxu0 %v598
        %v662 = vpop.f32.mrf.mxu0
        %v663 = vadd.f32 0.0, %v662
        %664 = vdwg.mxu0
        %665 = vmatpush.msra.mxu0 %v445
        %666 = vmatpush.msra.mxu0 %v441
        %667 = vmatpush.msra.mxu0 %v437
        %668 = vmatpush.msra.mxu0 %v433
        %669 = vmatpush.msra.mxu0 %v429
        %670 = vmatpush.msra.mxu0 %v425
        %671 = vmatpush.msra.mxu0 %v421
        %672 = vmatpush.msra.mxu0 %v417
        %673 = vmatpush.msra.mxu0 %v413
        %674 = vmatpush.msra.mxu0 %v409
        %675 = vmatpush.msra.mxu0 %v405
        %676 = vmatpush.msra.mxu0 %v401
        %677 = vmatpush.msra.mxu0 %v397
        %678 = vmatpush.msra.mxu0 %v393
        %679 = vmatpush.msra.mxu0 %v389
        %680 = vmatpush.msra.mxu0 %v385
        %681 = vmatmul.f32.gmra.mxu0 %v598
        %v682 = vpop.f32.mrf.mxu0
        %v683 = vadd.f32 0.0, %v682
        %684 = vdwg.mxu0
        %v685 = vadd.f32 %v601, %v623
        %v686 = vadd.f32 %v602, %v643
        %v687 = vadd.f32 %v603, %v663
        %v688 = vadd.f32 %v604, %v683
        %v689 = vxor.u32 %v685, 2147483648
        %v690 = vmul.f32 %v689, 1.442695
        %v691 = vpow.pop %v690
        %v692 = vadd.f32 %v691, 1.0
        %v693 = vrcp.pop %v692
        %v694 = vmul.f32 %v692, %v693
        %v695 = vsub.f32 1.0, %v694
        %v696 = vmul.f32 %v693, %v695
        %v697 = vadd.f32 %v693, %v696
        %vm698 = vweird.f32 %v692
        %vm699 = vweird.f32 %v693
        %vm700 = vmor %vm698, %vm699
        %v701 = vsel %vm700, %v693, %v697
        %v702 = vand.u32 2147483647, %v692
        %vm703 = vcmp.eq.f32.partialorder %v702, 8.507059e+37
        %v704 = vand.u32 %v692, 2147483648
        %v705 = vor.u32 1.1754944e-38, %v704
        %v706 = vsel %vm703, %v705, %v701
        %v707 = vmul.f32 1.0, %v706
        %v708 = vxor.u32 %v686, 2147483648
        %v709 = vmul.f32 %v708, 1.442695
        %v710 = vpow.pop %v709
        %v711 = vadd.f32 %v710, 1.0
        %v712 = vrcp.pop %v711
        %v713 = vmul.f32 %v711, %v712
        %v714 = vsub.f32 1.0, %v713
        %v715 = vmul.f32 %v712, %v714
        %v716 = vadd.f32 %v712, %v715
        %vm717 = vweird.f32 %v711
        %vm718 = vweird.f32 %v712
        %vm719 = vmor %vm717, %vm718
        %v720 = vsel %vm719, %v712, %v716
        %v721 = vand.u32 2147483647, %v711
        %vm722 = vcmp.eq.f32.partialorder %v721, 8.507059e+37
        %v723 = vand.u32 %v711, 2147483648
        %v724 = vor.u32 1.1754944e-38, %v723
        %v725 = vsel %vm722, %v724, %v720
        %v726 = vmul.f32 1.0, %v725
        %v727 = vtanh.pop %v687
        %v728 = vxor.u32 %v688, 2147483648
        %v729 = vmul.f32 %v728, 1.442695
        %v730 = vpow.pop %v729
        %v731 = vadd.f32 %v730, 1.0
        %v732 = vrcp.pop %v731
        %v733 = vmul.f32 %v731, %v732
        %v734 = vsub.f32 1.0, %v733
        %v735 = vmul.f32 %v732, %v734
        %v736 = vadd.f32 %v732, %v735
        %vm737 = vweird.f32 %v731
        %vm738 = vweird.f32 %v732
        %vm739 = vmor %vm737, %vm738
        %v740 = vsel %vm739, %v732, %v736
        %v741 = vand.u32 2147483647, %v731
        %vm742 = vcmp.eq.f32.partialorder %v741, 8.507059e+37
        %v743 = vand.u32 %v731, 2147483648
        %v744 = vor.u32 1.1754944e-38, %v743
        %v745 = vsel %vm742, %v744, %v740
        %v746 = vmul.f32 1.0, %v745
        %v747 = vmul.f32 %v726, %v596
        %v748 = vmul.f32 %v707, %v727
        %v749 = vadd.f32 %v747, %v748
        %v750 = vtanh.pop %v749
        %v751 = vmul.f32 %v746, %v750
        %s752 = scalar_lea.vmem %s247, 8
        %753 = vst [vmem:[%s752] sm:$0xff] %v751
        %754 = vst [vmem:[#allocation3] sm:$0xff] %v751
        %755 = vst [vmem:[#allocation4] sm:$0xff] %v749
        %s756 = smul.u32 2, %s21
        %p757 = scmp.lt.s32.totalorder %s756, 7
        %s758 = scalar_select %p757, %s756, 7
        %p759 = scmp.lt.s32.totalorder %s20, 0
        %s760 = scalar_select %p759, %s20, 0
        %s761 = sadd.s32 %s760, %s758
        %s762 = smul.addr %s761, 8
        %s763 = scalar_lea.vmem %s4, %s762
        // Predicated region
        $region45: #{lstm_classifier_forward.2} parent=35 // pred_check
          %p764 = pneg %p139
        $region46: #{lstm_classifier_forward.2} parent=35 // pred_check_branch
          %766 = sbr.rel (%p764) target = $region48
        $region47: #{lstm_classifier_forward.2} parent=35 // pred_region
          %s767 = smul.u32 2, %s21
        $region48: #{lstm_classifier_forward.2} parent=35 // pred_fallthru
          _
      $region36: #{lstm_classifier_forward.2} parent=5 // pred_fallthru
        _
      %p768 = scmp.le.s32.totalorder 2, %s11
      // Predicated region
      $region49: #{lstm_classifier_forward.2} parent=5 // pred_check
        %p769 = pneg %p768
      $region50: #{lstm_classifier_forward.2} parent=5 // pred_check_branch
        %771 = sbr.rel (%p769) target = $region52
      $region51: #{lstm_classifier_forward.2} parent=5 // pred_region
        %s772 = ssub.s32 %s11, 2
        // Predicated region
        $region53: #{lstm_classifier_forward.2} parent=51 // pred_check
          %p773 = pneg %p145
        $region54: #{lstm_classifier_forward.2} parent=51 // pred_check_branch
          %775 = sbr.rel (%p773) target = $region56
        $region55: #{lstm_classifier_forward.2} parent=51 // pred_region
          %s776 = smul.u32 2, %s23
          %p777 = scmp.lt.s32.totalorder %s776, 7
          %s778 = scalar_select %p777, %s776, 7
          %p779 = scmp.lt.s32.totalorder %s22, 0
          %s780 = scalar_select %p779, %s22, 0
          %s781 = sadd.s32 %s780, %s778
          %s782 = smul.addr %s781, 8
          %s783 = scalar_lea.vmem %s4, %s782
        $region56: #{lstm_classifier_forward.2} parent=51 // pred_fallthru
          _
      $region52: #{lstm_classifier_forward.2} parent=5 // pred_fallthru
        _
    $region6: #{lstm_classifier_forward.2} parent=1 // loop_footer
      %s15 = sadd.s32 1, %s11
    $region7: #{lstm_classifier_forward.2} parent=1 // loop_footer_branch
      %10 = sbr.rel target = $region3
    $region8: #{lstm_classifier_forward.2} parent=1 // loop_exit
      _
    %784 = vsyncpa [#allocation6], 1
    %s785 = scalar_lea.sflag [#allocation6], 1
    %786 = vsyncpa %s785, 1

// kernel: lstm_classifier_forward.3
$region0: #{lstm_classifier_forward.3}
  #allocation0 [shape = 'u32[]', space=smem, size = 0x4, offset = 0x4, fixed_abs, tag = 'smem constant byte address 0x4 - core index']
  #allocation1 [shape = 'u32[72,128]{1,0:T(1,128)}', space=vmem, size = 0x9000, scoped, tag = 'internal scratch']
  #allocation2 [shape = 'f32[2,8,512]{2,1,0:T(8,128)}', space=vmem, size = 0x8000, scoped, tag = 'scratch operand']
  #allocation3 [shape = 'f32[8,128]{1,0:T(8,128)}', space=vmem, size = 0x1000, scoped, tag = 'scratch operand']
  #allocation4 [shape = 'f32[8,128]{1,0:T(8,128)}', space=vmem, size = 0x1000, scoped, tag = 'scratch operand']
  %s0 = inlined_call_operand.vmem [shape: f32[8,8,128], index: 0, kind: input, shape index: {}]
  %s1 = inlined_call_operand.hbm [shape: f32[128,512], index: 1, kind: input, shape index: {}]
  %s2 = inlined_call_operand.vmem [shape: f32[1,512], index: 2, kind: input, shape index: {}]
  %s3 = inlined_call_operand.hbm [shape: f32[128,512], index: 3, kind: input, shape index: {}]
  %s4 = inlined_call_operand.vmem [shape: f32[128,4], index: 4, kind: input, shape index: {}]
  %s5 = inlined_call_operand.vmem [shape: f32[1,4], index: 5, kind: input, shape index: {}]
  %s6 = inlined_call_operand.vmem [shape: f32[8,4], index: 6, kind: output, shape index: {}]
  %s7 = sld [smem:[#allocation0]]
  $region73: #{lstm_classifier_forward.3} parent=0
    _
  %s9 = ssub.s32 1, %s7
  %s10 = scalar_select 0, %s9, %s7
  $region1: #{lstm_classifier_forward.3} parent=0
    #allocation5 [shape = 'u8[262144]{0}', space=vmem, size = 0x40000, scoped, tag = 'input window, operand 1, single buffered']
    #allocation6 [shape = 's32[2]{0}', space=sflag, size = 0x8, scoped, tag = 'scoped memory for lstm_classifier_forward.3']
    #allocation7 [shape = 'u8[262144]{0}', space=vmem, size = 0x40000, scoped, tag = 'input window, operand 3, single buffered']
    #allocation8 [shape = 's32[1]{0}', space=sflag, size = 0x4, scoped, tag = 'scoped memory for lstm_classifier_forward.3']
    %11 = vsyncpa [#allocation6], 0
    %12 = vsyncpa [#allocation8], 0
    loop: start=0, step=1, limit=6
    $region2: #{lstm_classifier_forward.3} parent=1 // loop_pre_header
      _
    $region3: #{lstm_classifier_forward.3} parent=1 // loop_header
      %s14 = sphi 0, %s18
      %p15 = scmp.ge.s32.totalorder %s14, 6
      %s21 = sphi 0, %s33
      %s22 = sphi 0, %s29
      %s23 = sphi 0, %s21
      %s24 = sphi 0, %s22
      %s25 = sphi 0, %s23
      %s26 = sphi 0, %s24
      %s38 = sphi 0, %s40
      %s41 = sphi 0, %s38
      %s42 = sphi 0, %s41
      %s58 = sphi 0, %s42
      %s62 = sphi 0, %s62
      %s64 = sphi 0, %s62
      %s65 = sphi 0, %s64
      %s79 = sphi 0, %s65
      %s83 = sphi 0, %s83
      %s85 = sphi 0, %s83
      %s86 = sphi 0, %s85
      %s100 = sphi 0, %s86
      %s104 = sphi 0, %s104
      %s106 = sphi 0, %s104
      %s107 = sphi 0, %s106
      %s121 = sphi 0, %s107
      %s125 = sphi 0, %s125
      %s127 = sphi 0, %s125
      %s128 = sphi 0, %s127
      %s142 = sphi 0, %s128
      %s146 = sphi 0, %s146
      %s148 = sphi 0, %s146
      %s149 = sphi 0, %s148
      %s163 = sphi 0, %s149
      %s169 = sphi 0, %s171
      %s172 = sphi 0, %s169
      %s173 = sphi 0, %s172
      %s189 = sphi 0, %s173
    $region4: #{lstm_classifier_forward.3} parent=1 // loop_header_branch
      %17 = sbr.rel (%p15) target = $region8
    $region5: #{lstm_classifier_forward.3} parent=1 // loop_body
      %s19 = ssub.s32 %s14, 1
      %s20 = ssub.s32 %s14, 2
      %s27 = sadd.s32 1, %s22
      %p28 = scmp.ge.s32.totalorder %s27, 4
      %s29 = scalar_select %p28, 0, %s27
      %s30 = sadd.s32 1, %s21
      %s31 = scalar_select %p28, %s30, %s21
      %p32 = scmp.ge.s32.totalorder %s31, 1
      %s33 = scalar_select %p32, 0, %s31
      %s34 = ssub.s32 %s22, %s29
      %s35 = ssub.s32 %s21, %s33
      %s36 = sor.u32 %s34, %s35
      %p37 = scmp.eq.s32.totalorder %s36, 0
      %s39 = sadd.s32 %s38, 1
      %s40 = scalar_select %p37, %s38, %s39
      %p43 = pneg %p37
      %p44 = scmp.eq.s32.totalorder %s14, 3
      %p45 = por %p43, %p44
      %p46 = scmp.ne.s32.totalorder %s38, %s41
      %p47 = scmp.eq.s32.totalorder %s14, 0
      %p48 = por %p46, %p47
      %p49 = scmp.ne.s32.totalorder %s38, %s41
      %p50 = scmp.eq.s32.totalorder %s19, 3
      %p51 = por %p49, %p50
      %p52 = scmp.ne.s32.totalorder %s41, %s42
      %p53 = scmp.eq.s32.totalorder %s19, 0
      %p54 = por %p52, %p53
      %p55 = scmp.ne.s32.totalorder %s41, %s42
      %p56 = scmp.eq.s32.totalorder %s20, 3
      %p57 = por %p55, %p56
      %p59 = scmp.ne.s32.totalorder %s42, %s58
      %p60 = scmp.eq.s32.totalorder %s20, 0
      %p61 = por %p59, %p60
      %s63 = sadd.s32 %s62, 1
      %p66 = scmp.eq.s32.totalorder %s14, 3
      %p67 = scmp.ne.s32.totalorder %s62, %s64
      %p68 = scmp.eq.s32.totalorder %s14, 0
      %p69 = por %p67, %p68
      %p70 = scmp.ne.s32.totalorder %s62, %s64
      %p71 = scmp.eq.s32.totalorder %s19, 3
      %p72 = por %p70, %p71
      %p73 = scmp.ne.s32.totalorder %s64, %s65
      %p74 = scmp.eq.s32.totalorder %s19, 0
      %p75 = por %p73, %p74
      %p76 = scmp.ne.s32.totalorder %s64, %s65
      %p77 = scmp.eq.s32.totalorder %s20, 3
      %p78 = por %p76, %p77
      %p80 = scmp.ne.s32.totalorder %s65, %s79
      %p81 = scmp.eq.s32.totalorder %s20, 0
      %p82 = por %p80, %p81
      %s84 = sadd.s32 %s83, 1
      %p87 = scmp.eq.s32.totalorder %s14, 3
      %p88 = scmp.ne.s32.totalorder %s83, %s85
      %p89 = scmp.eq.s32.totalorder %s14, 0
      %p90 = por %p88, %p89
      %p91 = scmp.ne.s32.totalorder %s83, %s85
      %p92 = scmp.eq.s32.totalorder %s19, 3
      %p93 = por %p91, %p92
      %p94 = scmp.ne.s32.totalorder %s85, %s86
      %p95 = scmp.eq.s32.totalorder %s19, 0
      %p96 = por %p94, %p95
      %p97 = scmp.ne.s32.totalorder %s85, %s86
      %p98 = scmp.eq.s32.totalorder %s20, 3
      %p99 = por %p97, %p98
      %p101 = scmp.ne.s32.totalorder %s86, %s100
      %p102 = scmp.eq.s32.totalorder %s20, 0
      %p103 = por %p101, %p102
      %s105 = sadd.s32 %s104, 1
      %p108 = scmp.eq.s32.totalorder %s14, 3
      %p109 = scmp.ne.s32.totalorder %s104, %s106
      %p110 = scmp.eq.s32.totalorder %s14, 0
      %p111 = por %p109, %p110
      %p112 = scmp.ne.s32.totalorder %s104, %s106
      %p113 = scmp.eq.s32.totalorder %s19, 3
      %p114 = por %p112, %p113
      %p115 = scmp.ne.s32.totalorder %s106, %s107
      %p116 = scmp.eq.s32.totalorder %s19, 0
      %p117 = por %p115, %p116
      %p118 = scmp.ne.s32.totalorder %s106, %s107
      %p119 = scmp.eq.s32.totalorder %s20, 3
      %p120 = por %p118, %p119
      %p122 = scmp.ne.s32.totalorder %s107, %s121
      %p123 = scmp.eq.s32.totalorder %s20, 0
      %p124 = por %p122, %p123
      %s126 = sadd.s32 %s125, 1
      %p129 = scmp.eq.s32.totalorder %s14, 3
      %p130 = scmp.ne.s32.totalorder %s125, %s127
      %p131 = scmp.eq.s32.totalorder %s14, 0
      %p132 = por %p130, %p131
      %p133 = scmp.ne.s32.totalorder %s125, %s127
      %p134 = scmp.eq.s32.totalorder %s19, 3
      %p135 = por %p133, %p134
      %p136 = scmp.ne.s32.totalorder %s127, %s128
      %p137 = scmp.eq.s32.totalorder %s19, 0
      %p138 = por %p136, %p137
      %p139 = scmp.ne.s32.totalorder %s127, %s128
      %p140 = scmp.eq.s32.totalorder %s20, 3
      %p141 = por %p139, %p140
      %p143 = scmp.ne.s32.totalorder %s128, %s142
      %p144 = scmp.eq.s32.totalorder %s20, 0
      %p145 = por %p143, %p144
      %s147 = sadd.s32 %s146, 1
      %p150 = scmp.eq.s32.totalorder %s14, 3
      %p151 = scmp.ne.s32.totalorder %s146, %s148
      %p152 = scmp.eq.s32.totalorder %s14, 0
      %p153 = por %p151, %p152
      %p154 = scmp.ne.s32.totalorder %s146, %s148
      %p155 = scmp.eq.s32.totalorder %s19, 3
      %p156 = por %p154, %p155
      %p157 = scmp.ne.s32.totalorder %s148, %s149
      %p158 = scmp.eq.s32.totalorder %s19, 0
      %p159 = por %p157, %p158
      %p160 = scmp.ne.s32.totalorder %s148, %s149
      %p161 = scmp.eq.s32.totalorder %s20, 3
      %p162 = por %p160, %p161
      %p164 = scmp.ne.s32.totalorder %s149, %s163
      %p165 = scmp.eq.s32.totalorder %s20, 0
      %p166 = por %p164, %p165
      %s167 = ssub.s32 %s21, %s33
      %p168 = scmp.eq.s32.totalorder %s167, 0
      %s170 = sadd.s32 %s169, 1
      %s171 = scalar_select %p168, %s169, %s170
      %p174 = pneg %p168
      %p175 = scmp.eq.s32.totalorder %s14, 3
      %p176 = por %p174, %p175
      %p177 = scmp.ne.s32.totalorder %s169, %s172
      %p178 = scmp.eq.s32.totalorder %s14, 0
      %p179 = por %p177, %p178
      %p180 = scmp.ne.s32.totalorder %s169, %s172
      %p181 = scmp.eq.s32.totalorder %s19, 3
      %p182 = por %p180, %p181
      %p183 = scmp.ne.s32.totalorder %s172, %s173
      %p184 = scmp.eq.s32.totalorder %s19, 0
      %p185 = por %p183, %p184
      %p186 = scmp.ne.s32.totalorder %s172, %s173
      %p187 = scmp.eq.s32.totalorder %s20, 3
      %p188 = por %p186, %p187
      %p190 = scmp.ne.s32.totalorder %s173, %s189
      %p191 = scmp.eq.s32.totalorder %s20, 0
      %p192 = por %p190, %p191
      %p193 = scmp.le.s32.totalorder 1, %s14
      %p194 = scmp.lt.s32.totalorder %s14, 5
      %p195 = pnand %p193, %p194
      %p196 = pneg %p195
      // Predicated region
      $region9: #{lstm_classifier_forward.3} parent=5 // pred_check
        _
      $region10: #{lstm_classifier_forward.3} parent=5 // pred_check_branch
        %198 = sbr.rel (%p195) target = $region12
      $region11: #{lstm_classifier_forward.3} parent=5 // pred_region
        %s199 = ssub.s32 %s14, 1
        // Predicated region
        $region13: #{lstm_classifier_forward.3} parent=11 // pred_check
          %p200 = pneg %p75
        $region14: #{lstm_classifier_forward.3} parent=11 // pred_check_branch
          %202 = sbr.rel (%p200) target = $region16
        $region15: #{lstm_classifier_forward.3} parent=11 // pred_region
          %204 = vsyncadd [#allocation6], 0
          %s205 = sshll.u32 %s1, 4
          %s206 = int_to_ptr.hbm [resolvable:$true] %s205
          %s207 = sshll.u32 [#allocation5], 4
          %s208 = int_to_ptr.vmem [resolvable:$true] %s207
          %213 = dma.hbm_to_vmem [thread:$0]  %s206, 8192, %s208, [#allocation6], 512, 512, 32
        $region16: #{lstm_classifier_forward.3} parent=11 // pred_fallthru
          _
        // Predicated region
        $region17: #{lstm_classifier_forward.3} parent=11 // pred_check
          %p214 = pneg %p96
        $region18: #{lstm_classifier_forward.3} parent=11 // pred_check_branch
          %216 = sbr.rel (%p214) target = $region20
        $region19: #{lstm_classifier_forward.3} parent=11 // pred_region
          _
        $region20: #{lstm_classifier_forward.3} parent=11 // pred_fallthru
          _
        // Predicated region
        $region21: #{lstm_classifier_forward.3} parent=11 // pred_check
          %p217 = pneg %p117
        $region22: #{lstm_classifier_forward.3} parent=11 // pred_check_branch
          %219 = sbr.rel (%p217) target = $region24
        $region23: #{lstm_classifier_forward.3} parent=11 // pred_region
          %221 = vsyncadd [#allocation8], 0
          %s222 = sshll.u32 %s3, 4
          %s223 = int_to_ptr.hbm [resolvable:$true] %s222
          %s224 = sshll.u32 [#allocation7], 4
          %s225 = int_to_ptr.vmem [resolvable:$true] %s224
          %230 = dma.hbm_to_vmem [thread:$0]  %s223, 8192, %s225, [#allocation8], 512, 512, 32
        $region24: #{lstm_classifier_forward.3} parent=11 // pred_fallthru
          _
        // Predicated region
        $region25: #{lstm_classifier_forward.3} parent=11 // pred_check
          %p231 = pneg %p138
        $region26: #{lstm_classifier_forward.3} parent=11 // pred_check_branch
          %233 = sbr.rel (%p231) target = $region28
        $region27: #{lstm_classifier_forward.3} parent=11 // pred_region
          _
        $region28: #{lstm_classifier_forward.3} parent=11 // pred_fallthru
          _
        // Predicated region
        $region29: #{lstm_classifier_forward.3} parent=11 // pred_check
          %p234 = pneg %p159
        $region30: #{lstm_classifier_forward.3} parent=11 // pred_check_branch
          %236 = sbr.rel (%p234) target = $region32
        $region31: #{lstm_classifier_forward.3} parent=11 // pred_region
          _
        $region32: #{lstm_classifier_forward.3} parent=11 // pred_fallthru
          _
      $region12: #{lstm_classifier_forward.3} parent=5 // pred_fallthru
        _
      %p237 = scmp.lt.s32.totalorder %s14, 4
      // Predicated region
      $region33: #{lstm_classifier_forward.3} parent=5 // pred_check
        %p238 = pneg %p237
      $region34: #{lstm_classifier_forward.3} parent=5 // pred_check_branch
        %240 = sbr.rel (%p238) target = $region36
      $region35: #{lstm_classifier_forward.3} parent=5 // pred_region
        // Predicated region
        $region37: #{lstm_classifier_forward.3} parent=35 // pred_check
          %p241 = pneg %p48
        $region38: #{lstm_classifier_forward.3} parent=35 // pred_check_branch
          %243 = sbr.rel (%p241) target = $region40
        $region39: #{lstm_classifier_forward.3} parent=35 // pred_region
          %s244 = smul.u32 2, %s22
          %p245 = scmp.lt.s32.totalorder %s244, 7
          %s246 = scalar_select %p245, %s244, 7
          %p247 = scmp.lt.s32.totalorder %s21, 0
          %s248 = scalar_select %p247, %s21, 0
          %s249 = sadd.s32 %s248, %s246
          %s250 = smul.addr %s249, 8
          %s251 = scalar_lea.vmem %s0, %s250
          %s252 = smul.u32 2, %s22
        $region40: #{lstm_classifier_forward.3} parent=35 // pred_fallthru
          _
      $region36: #{lstm_classifier_forward.3} parent=5 // pred_fallthru
        _
      %p253 = scmp.le.s32.totalorder 1, %s14
      %p254 = scmp.lt.s32.totalorder %s14, 5
      %p255 = pnand %p253, %p254
      %p256 = pneg %p255
      // Predicated region
      $region41: #{lstm_classifier_forward.3} parent=5 // pred_check
        _
      $region42: #{lstm_classifier_forward.3} parent=5 // pred_check_branch
        %258 = sbr.rel (%p255) target = $region44
      $region43: #{lstm_classifier_forward.3} parent=5 // pred_region
        %s259 = ssub.s32 %s14, 1
        // Predicated region
        $region45: #{lstm_classifier_forward.3} parent=43 // pred_check
          %p260 = pneg %p75
        $region46: #{lstm_classifier_forward.3} parent=43 // pred_check_branch
          %262 = sbr.rel (%p260) target = $region48
        $region47: #{lstm_classifier_forward.3} parent=43 // pred_region
          %264 = dma.done [#allocation6], 8192
        $region48: #{lstm_classifier_forward.3} parent=43 // pred_fallthru
          _
        // Predicated region
        $region49: #{lstm_classifier_forward.3} parent=43 // pred_check
          %p265 = pneg %p117
        $region50: #{lstm_classifier_forward.3} parent=43 // pred_check_branch
          %267 = sbr.rel (%p265) target = $region52
        $region51: #{lstm_classifier_forward.3} parent=43 // pred_region
          %269 = dma.done [#allocation8], 8192
        $region52: #{lstm_classifier_forward.3} parent=43 // pred_fallthru
          _
        %s270 = smul.u32 2, %s24
        %p271 = scmp.lt.s32.totalorder %s270, 7
        %s272 = scalar_select %p271, %s270, 7
        %p273 = scmp.lt.s32.totalorder %s23, 0
        %s274 = scalar_select %p273, %s23, 0
        %s275 = sadd.s32 %s274, %s272
        %s276 = smul.addr %s275, 8
        %s277 = scalar_lea.vmem %s0, %s276
        %p278 = pneg %p54
        %p279 = pneg %p51
        %p280 = pneg %p75
        %p281 = pneg %p72
        %p282 = pneg %p96
        %p283 = pneg %p93
        %p284 = pneg %p117
        %p285 = pneg %p114
        %p286 = pneg %p138
        %p287 = pneg %p135
        %p288 = pneg %p159
        %p289 = pneg %p156
        %p290 = pneg %p185
        %p291 = pneg %p182
        %p292 = scmp.lt.s32.totalorder %s23, 0
        %s293 = scalar_select %p292, %s23, 0
        %s294 = smul.addr %s293, 8
        %s295 = scalar_lea.vmem %s6, %s294
        %s296 = smul.u32 2, %s24
        %p297 = scmp.lt.s32.totalorder %s296, 7
        %s298 = scalar_select %p297, %s296, 7
        %p299 = scmp.lt.s32.totalorder %s23, 0
        %s300 = scalar_select %p299, %s23, 0
        %s301 = sadd.s32 %s300, %s298
        %s302 = smul.addr %s301, 8
        %s303 = scalar_lea.vmem %s0, %s302
        %s304 = smul.u32 2, %s24
        %p305 = scmp.lt.s32.totalorder %s23, 0
        %s306 = scalar_select %p305, %s23, 0
        %s307 = smul.addr %s306, 8
        %s308 = scalar_lea.vmem %s6, %s307
        %p309 = scmp.eq.s32.totalorder %s24, 0
        // Predicated region
        $region53: #{lstm_classifier_forward.3} parent=43 // pred_check
          %p310 = pneg %p309
        $region54: #{lstm_classifier_forward.3} parent=43 // pred_check_branch
          %312 = sbr.rel (%p310) target = $region56
        $region55: #{lstm_classifier_forward.3} parent=43 // pred_region
          %313 = vst [vmem:[#allocation3] sm:$0xff] 0.0
          %314 = vst [vmem:[#allocation4] sm:$0xff] 0.0
        $region56: #{lstm_classifier_forward.3} parent=43 // pred_fallthru
          _
        %v315 = vld [vmem:[%s303] sm:$0xff]
        %v316 = vld [vmem:[%s303 + $0x8] sm:$0xff]
        %v317 = vld [vmem:[#allocation5] sm:$0xff]
        %v318 = vld [vmem:[#allocation5 + $0x8] sm:$0xff]
        %v319 = vld [vmem:[#allocation5 + $0x10] sm:$0xff]
        %v320 = vld [vmem:[#allocation5 + $0x18] sm:$0xff]
        %v321 = vld [vmem:[#allocation5 + $0x20] sm:$0xff]
        %v322 = vld [vmem:[#allocation5 + $0x28] sm:$0xff]
        %v323 = vld [vmem:[#allocation5 + $0x30] sm:$0xff]
        %v324 = vld [vmem:[#allocation5 + $0x38] sm:$0xff]
        %v325 = vld [vmem:[#allocation5 + $0x40] sm:$0xff]
        %v326 = vld [vmem:[#allocation5 + $0x48] sm:$0xff]
        %v327 = vld [vmem:[#allocation5 + $0x50] sm:$0xff]
        %v328 = vld [vmem:[#allocation5 + $0x58] sm:$0xff]
        %v329 = vld [vmem:[#allocation5 + $0x60] sm:$0xff]
        %v330 = vld [vmem:[#allocation5 + $0x68] sm:$0xff]
        %v331 = vld [vmem:[#allocation5 + $0x70] sm:$0xff]
        %v332 = vld [vmem:[#allocation5 + $0x78] sm:$0xff]
        %v333 = vld [vmem:[#allocation5 + $0x80] sm:$0xff]
        %v334 = vld [vmem:[#allocation5 + $0x88] sm:$0xff]
        %v335 = vld [vmem:[#allocation5 + $0x90] sm:$0xff]
        %v336 = vld [vmem:[#allocation5 + $0x98] sm:$0xff]
        %v337 = vld [vmem:[#allocation5 + $0xa0] sm:$0xff]
        %v338 = vld [vmem:[#allocation5 + $0xa8] sm:$0xff]
        %v339 = vld [vmem:[#allocation5 + $0xb0] sm:$0xff]
        %v340 = vld [vmem:[#allocation5 + $0xb8] sm:$0xff]
        %v341 = vld [vmem:[#allocation5 + $0xc0] sm:$0xff]
        %v342 = vld [vmem:[#allocation5 + $0xc8] sm:$0xff]
        %v343 = vld [vmem:[#allocation5 + $0xd0] sm:$0xff]
        %v344 = vld [vmem:[#allocation5 + $0xd8] sm:$0xff]
        %v345 = vld [vmem:[#allocation5 + $0xe0] sm:$0xff]
        %v346 = vld [vmem:[#allocation5 + $0xe8] sm:$0xff]
        %v347 = vld [vmem:[#allocation5 + $0xf0] sm:$0xff]
        %v348 = vld [vmem:[#allocation5 + $0xf8] sm:$0xff]
        %v349 = vld [vmem:[#allocation5 + $0x100] sm:$0xff]
        %v350 = vld [vmem:[#allocation5 + $0x108] sm:$0xff]
        %v351 = vld [vmem:[#allocation5 + $0x110] sm:$0xff]
        %v352 = vld [vmem:[#allocation5 + $0x118] sm:$0xff]
        %v353 = vld [vmem:[#allocation5 + $0x120] sm:$0xff]
        %v354 = vld [vmem:[#allocation5 + $0x128] sm:$0xff]
        %v355 = vld [vmem:[#allocation5 + $0x130] sm:$0xff]
        %v356 = vld [vmem:[#allocation5 + $0x138] sm:$0xff]
        %v357 = vld [vmem:[#allocation5 + $0x140] sm:$0xff]
        %v358 = vld [vmem:[#allocation5 + $0x148] sm:$0xff]
        %v359 = vld [vmem:[#allocation5 + $0x150] sm:$0xff]
        %v360 = vld [vmem:[#allocation5 + $0x158] sm:$0xff]
        %v361 = vld [vmem:[#allocation5 + $0x160] sm:$0xff]
        %v362 = vld [vmem:[#allocation5 + $0x168] sm:$0xff]
        %v363 = vld [vmem:[#allocation5 + $0x170] sm:$0xff]
        %v364 = vld [vmem:[#allocation5 + $0x178] sm:$0xff]
        %v365 = vld [vmem:[#allocation5 + $0x180] sm:$0xff]
        %v366 = vld [vmem:[#allocation5 + $0x188] sm:$0xff]
        %v367 = vld [vmem:[#allocation5 + $0x190] sm:$0xff]
        %v368 = vld [vmem:[#allocation5 + $0x198] sm:$0xff]
        %v369 = vld [vmem:[#allocation5 + $0x1a0] sm:$0xff]
        %v370 = vld [vmem:[#allocation5 + $0x1a8] sm:$0xff]
        %v371 = vld [vmem:[#allocation5 + $0x1b0] sm:$0xff]
        %v372 = vld [vmem:[#allocation5 + $0x1b8] sm:$0xff]
        %v373 = vld [vmem:[#allocation5 + $0x1c0] sm:$0xff]
        %v374 = vld [vmem:[#allocation5 + $0x1c8] sm:$0xff]
        %v375 = vld [vmem:[#allocation5 + $0x1d0] sm:$0xff]
        %v376 = vld [vmem:[#allocation5 + $0x1d8] sm:$0xff]
        %v377 = vld [vmem:[#allocation5 + $0x1e0] sm:$0xff]
        %v378 = vld [vmem:[#allocation5 + $0x1e8] sm:$0xff]
        %v379 = vld [vmem:[#allocation5 + $0x1f0] sm:$0xff]
        %v380 = vld [vmem:[#allocation5 + $0x1f8] sm:$0xff]
        %v381 = vld [vmem:[%s2] sm:$0xf]
        %v383 = vperm.slane %v381, 0
        %v384 = vperm.slane %v381, 1
        %v385 = vperm.slane %v381, 2
        %v386 = vperm.slane %v381, 3
        %391 = vmatpush.msra.mxu0 %v377
        %392 = vmatpush.msra.mxu0 %v373
        %393 = vmatpush.msra.mxu0 %v369
        %394 = vmatpush.msra.mxu0 %v365
        %395 = vmatpush.msra.mxu0 %v361
        %396 = vmatpush.msra.mxu0 %v357
        %397 = vmatpush.msra.mxu0 %v353
        %398 = vmatpush.msra.mxu0 %v349
        %399 = vmatpush.msra.mxu0 %v345
        %400 = vmatpush.msra.mxu0 %v341
        %401 = vmatpush.msra.mxu0 %v337
        %402 = vmatpush.msra.mxu0 %v333
        %403 = vmatpush.msra.mxu0 %v329
        %404 = vmatpush.msra.mxu0 %v325
        %405 = vmatpush.msra.mxu0 %v321
        %406 = vmatpush.msra.mxu0 %v317
        %407 = vmatmul.f32.gmra.mxu0 %v315
        %v408 = vpop.f32.mrf.mxu0
        %v409 = vadd.f32 %v383, %v408
        %410 = vmatmul.f32.gmra.mxu0 %v316
        %v411 = vpop.f32.mrf.mxu0
        %v412 = vadd.f32 %v383, %v411
        %413 = vdwg.mxu0
        %414 = vmatpush.msra.mxu0 %v378
        %415 = vmatpush.msra.mxu0 %v374
        %416 = vmatpush.msra.mxu0 %v370
        %417 = vmatpush.msra.mxu0 %v366
        %418 = vmatpush.msra.mxu0 %v362
        %419 = vmatpush.msra.mxu0 %v358
        %420 = vmatpush.msra.mxu0 %v354
        %421 = vmatpush.msra.mxu0 %v350
        %422 = vmatpush.msra.mxu0 %v346
        %423 = vmatpush.msra.mxu0 %v342
        %424 = vmatpush.msra.mxu0 %v338
        %425 = vmatpush.msra.mxu0 %v334
        %426 = vmatpush.msra.mxu0 %v330
        %427 = vmatpush.msra.mxu0 %v326
        %428 = vmatpush.msra.mxu0 %v322
        %429 = vmatpush.msra.mxu0 %v318
        %430 = vmatmul.f32.gmra.mxu0 %v315
        %v431 = vpop.f32.mrf.mxu0
        %v432 = vadd.f32 %v384, %v431
        %433 = vmatmul.f32.gmra.mxu0 %v316
        %v434 = vpop.f32.mrf.mxu0
        %v435 = vadd.f32 %v384, %v434
        %436 = vdwg.mxu0
        %437 = vmatpush.msra.mxu0 %v379
        %438 = vmatpush.msra.mxu0 %v375
        %439 = vmatpush.msra.mxu0 %v371
        %440 = vmatpush.msra.mxu0 %v367
        %441 = vmatpush.msra.mxu0 %v363
        %442 = vmatpush.msra.mxu0 %v359
        %443 = vmatpush.msra.mxu0 %v355
        %444 = vmatpush.msra.mxu0 %v351
        %445 = vmatpush.msra.mxu0 %v347
        %446 = vmatpush.msra.mxu0 %v343
        %447 = vmatpush.msra.mxu0 %v339
        %448 = vmatpush.msra.mxu0 %v335
        %449 = vmatpush.msra.mxu0 %v331
        %450 = vmatpush.msra.mxu0 %v327
        %451 = vmatpush.msra.mxu0 %v323
        %452 = vmatpush.msra.mxu0 %v319
        %453 = vmatmul.f32.gmra.mxu0 %v315
        %v454 = vpop.f32.mrf.mxu0
        %v455 = vadd.f32 %v385, %v454
        %456 = vmatmul.f32.gmra.mxu0 %v316
        %v457 = vpop.f32.mrf.mxu0
        %v458 = vadd.f32 %v385, %v457
        %459 = vdwg.mxu0
        %460 = vmatpush.msra.mxu0 %v380
        %461 = vmatpush.msra.mxu0 %v376
        %462 = vmatpush.msra.mxu0 %v372
        %463 = vmatpush.msra.mxu0 %v368
        %464 = vmatpush.msra.mxu0 %v364
        %465 = vmatpush.msra.mxu0 %v360
        %466 = vmatpush.msra.mxu0 %v356
        %467 = vmatpush.msra.mxu0 %v352
        %468 = vmatpush.msra.mxu0 %v348
        %469 = vmatpush.msra.mxu0 %v344
        %470 = vmatpush.msra.mxu0 %v340
        %471 = vmatpush.msra.mxu0 %v336
        %472 = vmatpush.msra.mxu0 %v332
        %473 = vmatpush.msra.mxu0 %v328
        %474 = vmatpush.msra.mxu0 %v324
        %475 = vmatpush.msra.mxu0 %v320
        %476 = vmatmul.f32.gmra.mxu0 %v315
        %v477 = vpop.f32.mrf.mxu0
        %v478 = vadd.f32 %v386, %v477
        %479 = vmatmul.f32.gmra.mxu0 %v316
        %v480 = vpop.f32.mrf.mxu0
        %v481 = vadd.f32 %v386, %v480
        %482 = vdwg.mxu0
        %483 = vst [vmem:[#allocation2] sm:$0xff] %v409
        %484 = vst [vmem:[#allocation2 + $0x8] sm:$0xff] %v432
        %485 = vst [vmem:[#allocation2 + $0x10] sm:$0xff] %v455
        %486 = vst [vmem:[#allocation2 + $0x18] sm:$0xff] %v478
        %487 = vst [vmem:[#allocation2 + $0x20] sm:$0xff] %v412
        %488 = vst [vmem:[#allocation2 + $0x28] sm:$0xff] %v435
        %489 = vst [vmem:[#allocation2 + $0x30] sm:$0xff] %v458
        %490 = vst [vmem:[#allocation2 + $0x38] sm:$0xff] %v481
        %v491 = vld [vmem:[#allocation7] sm:$0xff]
        %v492 = vld [vmem:[#allocation7 + $0x8] sm:$0xff]
        %v493 = vld [vmem:[#allocation7 + $0x10] sm:$0xff]
        %v494 = vld [vmem:[#allocation7 + $0x18] sm:$0xff]
        %v495 = vld [vmem:[#allocation7 + $0x20] sm:$0xff]
        %v496 = vld [vmem:[#allocation7 + $0x28] sm:$0xff]
        %v497 = vld [vmem:[#allocation7 + $0x30] sm:$0xff]
        %v498 = vld [vmem:[#allocation7 + $0x38] sm:$0xff]
        %v499 = vld [vmem:[#allocation7 + $0x40] sm:$0xff]
        %v500 = vld [vmem:[#allocation7 + $0x48] sm:$0xff]
        %v501 = vld [vmem:[#allocation7 + $0x50] sm:$0xff]
        %v502 = vld [vmem:[#allocation7 + $0x58] sm:$0xff]
        %v503 = vld [vmem:[#allocation7 + $0x60] sm:$0xff]
        %v504 = vld [vmem:[#allocation7 + $0x68] sm:$0xff]
        %v505 = vld [vmem:[#allocation7 + $0x70] sm:$0xff]
        %v506 = vld [vmem:[#allocation7 + $0x78] sm:$0xff]
        %v507 = vld [vmem:[#allocation7 + $0x80] sm:$0xff]
        %v508 = vld [vmem:[#allocation7 + $0x88] sm:$0xff]
        %v509 = vld [vmem:[#allocation7 + $0x90] sm:$0xff]
        %v510 = vld [vmem:[#allocation7 + $0x98] sm:$0xff]
        %v511 = vld [vmem:[#allocation7 + $0xa0] sm:$0xff]
        %v512 = vld [vmem:[#allocation7 + $0xa8] sm:$0xff]
        %v513 = vld [vmem:[#allocation7 + $0xb0] sm:$0xff]
        %v514 = vld [vmem:[#allocation7 + $0xb8] sm:$0xff]
        %v515 = vld [vmem:[#allocation7 + $0xc0] sm:$0xff]
        %v516 = vld [vmem:[#allocation7 + $0xc8] sm:$0xff]
        %v517 = vld [vmem:[#allocation7 + $0xd0] sm:$0xff]
        %v518 = vld [vmem:[#allocation7 + $0xd8] sm:$0xff]
        %v519 = vld [vmem:[#allocation7 + $0xe0] sm:$0xff]
        %v520 = vld [vmem:[#allocation7 + $0xe8] sm:$0xff]
        %v521 = vld [vmem:[#allocation7 + $0xf0] sm:$0xff]
        %v522 = vld [vmem:[#allocation7 + $0xf8] sm:$0xff]
        %v523 = vld [vmem:[#allocation7 + $0x100] sm:$0xff]
        %v524 = vld [vmem:[#allocation7 + $0x108] sm:$0xff]
        %v525 = vld [vmem:[#allocation7 + $0x110] sm:$0xff]
        %v526 = vld [vmem:[#allocation7 + $0x118] sm:$0xff]
        %v527 = vld [vmem:[#allocation7 + $0x120] sm:$0xff]
        %v528 = vld [vmem:[#allocation7 + $0x128] sm:$0xff]
        %v529 = vld [vmem:[#allocation7 + $0x130] sm:$0xff]
        %v530 = vld [vmem:[#allocation7 + $0x138] sm:$0xff]
        %v531 = vld [vmem:[#allocation7 + $0x140] sm:$0xff]
        %v532 = vld [vmem:[#allocation7 + $0x148] sm:$0xff]
        %v533 = vld [vmem:[#allocation7 + $0x150] sm:$0xff]
        %v534 = vld [vmem:[#allocation7 + $0x158] sm:$0xff]
        %v535 = vld [vmem:[#allocation7 + $0x160] sm:$0xff]
        %v536 = vld [vmem:[#allocation7 + $0x168] sm:$0xff]
        %v537 = vld [vmem:[#allocation7 + $0x170] sm:$0xff]
        %v538 = vld [vmem:[#allocation7 + $0x178] sm:$0xff]
        %v539 = vld [vmem:[#allocation7 + $0x180] sm:$0xff]
        %v540 = vld [vmem:[#allocation7 + $0x188] sm:$0xff]
        %v541 = vld [vmem:[#allocation7 + $0x190] sm:$0xff]
        %v542 = vld [vmem:[#allocation7 + $0x198] sm:$0xff]
        %v543 = vld [vmem:[#allocation7 + $0x1a0] sm:$0xff]
        %v544 = vld [vmem:[#allocation7 + $0x1a8] sm:$0xff]
        %v545 = vld [vmem:[#allocation7 + $0x1b0] sm:$0xff]
        %v546 = vld [vmem:[#allocation7 + $0x1b8] sm:$0xff]
        %v547 = vld [vmem:[#allocation7 + $0x1c0] sm:$0xff]
        %v548 = vld [vmem:[#allocation7 + $0x1c8] sm:$0xff]
        %v549 = vld [vmem:[#allocation7 + $0x1d0] sm:$0xff]
        %v550 = vld [vmem:[#allocation7 + $0x1d8] sm:$0xff]
        %v551 = vld [vmem:[#allocation7 + $0x1e0] sm:$0xff]
        %v552 = vld [vmem:[#allocation7 + $0x1e8] sm:$0xff]
        %v553 = vld [vmem:[#allocation7 + $0x1f0] sm:$0xff]
        %v554 = vld [vmem:[#allocation7 + $0x1f8] sm:$0xff]
        %v555 = vld [vmem:[#allocation3] sm:$0xff]
        %v556 = vld [vmem:[#allocation4] sm:$0xff]
        %v557 = vld [vmem:[#allocation2] sm:$0xff]
        %v558 = vld [vmem:[#allocation2 + $0x8] sm:$0xff]
        %v559 = vld [vmem:[#allocation2 + $0x10] sm:$0xff]
        %v560 = vld [vmem:[#allocation2 + $0x18] sm:$0xff]
        %561 = vmatpush.msra.mxu0 %v551
        %562 = vmatpush.msra.mxu0 %v547
        %563 = vmatpush.msra.mxu0 %v543
        %564 = vmatpush.msra.mxu0 %v539
        %565 = vmatpush.msra.mxu0 %v535
        %566 = vmatpush.msra.mxu0 %v531
        %567 = vmatpush.msra.mxu0 %v527
        %568 = vmatpush.msra.mxu0 %v523
        %569 = vmatpush.msra.mxu0 %v519
        %570 = vmatpush.msra.mxu0 %v515
        %571 = vmatpush.msra.mxu0 %v511
        %572 = vmatpush.msra.mxu0 %v507
        %573 = vmatpush.msra.mxu0 %v503
        %574 = vmatpush.msra.mxu0 %v499
        %575 = vmatpush.msra.mxu0 %v495
        %576 = vmatpush.msra.mxu0 %v491
        %577 = vmatmul.f32.gmra.mxu0 %v555
        %v578 = vpop.f32.mrf.mxu0
        %v579 = vadd.f32 0.0, %v578
        %580 = vdwg.mxu0
        %581 = vmatpush.msra.mxu0 %v552
        %582 = vmatpush.msra.mxu0 %v548
        %583 = vmatpush.msra.mxu0 %v544
        %584 = vmatpush.msra.mxu0 %v540
        %585 = vmatpush.msra.mxu0 %v536
        %586 = vmatpush.msra.mxu0 %v532
        %587 = vmatpush.msra.mxu0 %v528
        %588 = vmatpush.msra.mxu0 %v524
        %589 = vmatpush.msra.mxu0 %v520
        %590 = vmatpush.msra.mxu0 %v516
        %591 = vmatpush.msra.mxu0 %v512
        %592 = vmatpush.msra.mxu0 %v508
        %593 = vmatpush.msra.mxu0 %v504
        %594 = vmatpush.msra.mxu0 %v500
        %595 = vmatpush.msra.mxu0 %v496
        %596 = vmatpush.msra.mxu0 %v492
        %597 = vmatmul.f32.gmra.mxu0 %v555
        %v598 = vpop.f32.mrf.mxu0
        %v599 = vadd.f32 0.0, %v598
        %600 = vdwg.mxu0
        %601 = vmatpush.msra.mxu0 %v553
        %602 = vmatpush.msra.mxu0 %v549
        %603 = vmatpush.msra.mxu0 %v545
        %604 = vmatpush.msra.mxu0 %v541
        %605 = vmatpush.msra.mxu0 %v537
        %606 = vmatpush.msra.mxu0 %v533
        %607 = vmatpush.msra.mxu0 %v529
        %608 = vmatpush.msra.mxu0 %v525
        %609 = vmatpush.msra.mxu0 %v521
        %610 = vmatpush.msra.mxu0 %v517
        %611 = vmatpush.msra.mxu0 %v513
        %612 = vmatpush.msra.mxu0 %v509
        %613 = vmatpush.msra.mxu0 %v505
        %614 = vmatpush.msra.mxu0 %v501
        %615 = vmatpush.msra.mxu0 %v497
        %616 = vmatpush.msra.mxu0 %v493
        %617 = vmatmul.f32.gmra.mxu0 %v555
        %v618 = vpop.f32.mrf.mxu0
        %v619 = vadd.f32 0.0, %v618
        %620 = vdwg.mxu0
        %621 = vmatpush.msra.mxu0 %v554
        %622 = vmatpush.msra.mxu0 %v550
        %623 = vmatpush.msra.mxu0 %v546
        %624 = vmatpush.msra.mxu0 %v542
        %625 = vmatpush.msra.mxu0 %v538
        %626 = vmatpush.msra.mxu0 %v534
        %627 = vmatpush.msra.mxu0 %v530
        %628 = vmatpush.msra.mxu0 %v526
        %629 = vmatpush.msra.mxu0 %v522
        %630 = vmatpush.msra.mxu0 %v518
        %631 = vmatpush.msra.mxu0 %v514
        %632 = vmatpush.msra.mxu0 %v510
        %633 = vmatpush.msra.mxu0 %v506
        %634 = vmatpush.msra.mxu0 %v502
        %635 = vmatpush.msra.mxu0 %v498
        %636 = vmatpush.msra.mxu0 %v494
        %637 = vmatmul.f32.gmra.mxu0 %v555
        %v638 = vpop.f32.mrf.mxu0
        %v639 = vadd.f32 0.0, %v638
        %640 = vdwg.mxu0
        %v641 = vadd.f32 %v557, %v579
        %v642 = vadd.f32 %v558, %v599
        %v643 = vadd.f32 %v559, %v619
        %v644 = vadd.f32 %v560, %v639
        %v645 = vxor.u32 %v641, 2147483648
        %v646 = vmul.f32 %v645, 1.442695
        %v647 = vpow.pop %v646
        %v648 = vadd.f32 %v647, 1.0
        %v649 = vrcp.pop %v648
        %v650 = vmul.f32 %v648, %v649
        %v651 = vsub.f32 1.0, %v650
        %v652 = vmul.f32 %v649, %v651
        %v653 = vadd.f32 %v649, %v652
        %vm654 = vweird.f32 %v648
        %vm655 = vweird.f32 %v649
        %vm656 = vmor %vm654, %vm655
        %v657 = vsel %vm656, %v649, %v653
        %v658 = vand.u32 2147483647, %v648
        %vm659 = vcmp.eq.f32.partialorder %v658, 8.507059e+37
        %v660 = vand.u32 %v648, 2147483648
        %v661 = vor.u32 1.1754944e-38, %v660
        %v662 = vsel %vm659, %v661, %v657
        %v663 = vmul.f32 1.0, %v662
        %v664 = vxor.u32 %v642, 2147483648
        %v665 = vmul.f32 %v664, 1.442695
        %v666 = vpow.pop %v665
        %v667 = vadd.f32 %v666, 1.0
        %v668 = vrcp.pop %v667
        %v669 = vmul.f32 %v667, %v668
        %v670 = vsub.f32 1.0, %v669
        %v671 = vmul.f32 %v668, %v670
        %v672 = vadd.f32 %v668, %v671
        %vm673 = vweird.f32 %v667
        %vm674 = vweird.f32 %v668
        %vm675 = vmor %vm673, %vm674
        %v676 = vsel %vm675, %v668, %v672
        %v677 = vand.u32 2147483647, %v667
        %vm678 = vcmp.eq.f32.partialorder %v677, 8.507059e+37
        %v679 = vand.u32 %v667, 2147483648
        %v680 = vor.u32 1.1754944e-38, %v679
        %v681 = vsel %vm678, %v680, %v676
        %v682 = vmul.f32 1.0, %v681
        %v683 = vtanh.pop %v643
        %v684 = vxor.u32 %v644, 2147483648
        %v685 = vmul.f32 %v684, 1.442695
        %v686 = vpow.pop %v685
        %v687 = vadd.f32 %v686, 1.0
        %v688 = vrcp.pop %v687
        %v689 = vmul.f32 %v687, %v688
        %v690 = vsub.f32 1.0, %v689
        %v691 = vmul.f32 %v688, %v690
        %v692 = vadd.f32 %v688, %v691
        %vm693 = vweird.f32 %v687
        %vm694 = vweird.f32 %v688
        %vm695 = vmor %vm693, %vm694
        %v696 = vsel %vm695, %v688, %v692
        %v697 = vand.u32 2147483647, %v687
        %vm698 = vcmp.eq.f32.partialorder %v697, 8.507059e+37
        %v699 = vand.u32 %v687, 2147483648
        %v700 = vor.u32 1.1754944e-38, %v699
        %v701 = vsel %vm698, %v700, %v696
        %v702 = vmul.f32 1.0, %v701
        %v703 = vmul.f32 %v682, %v556
        %v704 = vmul.f32 %v663, %v683
        %v705 = vadd.f32 %v703, %v704
        %v706 = vtanh.pop %v705
        %v707 = vmul.f32 %v702, %v706
        %s708 = scalar_lea.vmem [#allocation2], 32
        %v709 = vld [vmem:[%s708] sm:$0xff]
        %v710 = vld [vmem:[%s708 + $0x8] sm:$0xff]
        %v711 = vld [vmem:[%s708 + $0x10] sm:$0xff]
        %v712 = vld [vmem:[%s708 + $0x18] sm:$0xff]
        %713 = vmatpush.msra.mxu0 %v551
        %714 = vmatpush.msra.mxu0 %v547
        %715 = vmatpush.msra.mxu0 %v543
        %716 = vmatpush.msra.mxu0 %v539
        %717 = vmatpush.msra.mxu0 %v535
        %718 = vmatpush.msra.mxu0 %v531
        %719 = vmatpush.msra.mxu0 %v527
        %720 = vmatpush.msra.mxu0 %v523
        %721 = vmatpush.msra.mxu0 %v519
        %722 = vmatpush.msra.mxu0 %v515
        %723 = vmatpush.msra.mxu0 %v511
        %724 = vmatpush.msra.mxu0 %v507
        %725 = vmatpush.msra.mxu0 %v503
        %726 = vmatpush.msra.mxu0 %v499
        %727 = vmatpush.msra.mxu0 %v495
        %728 = vmatpush.msra.mxu0 %v491
        %729 = vmatmul.f32.gmra.mxu0 %v707
        %v730 = vpop.f32.mrf.mxu0
        %v731 = vadd.f32 0.0, %v730
        %732 = vdwg.mxu0
        %733 = vmatpush.msra.mxu0 %v552
        %734 = vmatpush.msra.mxu0 %v548
        %735 = vmatpush.msra.mxu0 %v544
        %736 = vmatpush.msra.mxu0 %v540
        %737 = vmatpush.msra.mxu0 %v536
        %738 = vmatpush.msra.mxu0 %v532
        %739 = vmatpush.msra.mxu0 %v528
        %740 = vmatpush.msra.mxu0 %v524
        %741 = vmatpush.msra.mxu0 %v520
        %742 = vmatpush.msra.mxu0 %v516
        %743 = vmatpush.msra.mxu0 %v512
        %744 = vmatpush.msra.mxu0 %v508
        %745 = vmatpush.msra.mxu0 %v504
        %746 = vmatpush.msra.mxu0 %v500
        %747 = vmatpush.msra.mxu0 %v496
        %748 = vmatpush.msra.mxu0 %v492
        %749 = vmatmul.f32.gmra.mxu0 %v707
        %v750 = vpop.f32.mrf.mxu0
        %v751 = vadd.f32 0.0, %v750
        %752 = vdwg.mxu0
        %753 = vmatpush.msra.mxu0 %v553
        %754 = vmatpush.msra.mxu0 %v549
        %755 = vmatpush.msra.mxu0 %v545
        %756 = vmatpush.msra.mxu0 %v541
        %757 = vmatpush.msra.mxu0 %v537
        %758 = vmatpush.msra.mxu0 %v533
        %759 = vmatpush.msra.mxu0 %v529
        %760 = vmatpush.msra.mxu0 %v525
        %761 = vmatpush.msra.mxu0 %v521
        %762 = vmatpush.msra.mxu0 %v517
        %763 = vmatpush.msra.mxu0 %v513
        %764 = vmatpush.msra.mxu0 %v509
        %765 = vmatpush.msra.mxu0 %v505
        %766 = vmatpush.msra.mxu0 %v501
        %767 = vmatpush.msra.mxu0 %v497
        %768 = vmatpush.msra.mxu0 %v493
        %769 = vmatmul.f32.gmra.mxu0 %v707
        %v770 = vpop.f32.mrf.mxu0
        %v771 = vadd.f32 0.0, %v770
        %772 = vdwg.mxu0
        %773 = vmatpush.msra.mxu0 %v554
        %774 = vmatpush.msra.mxu0 %v550
        %775 = vmatpush.msra.mxu0 %v546
        %776 = vmatpush.msra.mxu0 %v542
        %777 = vmatpush.msra.mxu0 %v538
        %778 = vmatpush.msra.mxu0 %v534
        %779 = vmatpush.msra.mxu0 %v530
        %780 = vmatpush.msra.mxu0 %v526
        %781 = vmatpush.msra.mxu0 %v522
        %782 = vmatpush.msra.mxu0 %v518
        %783 = vmatpush.msra.mxu0 %v514
        %784 = vmatpush.msra.mxu0 %v510
        %785 = vmatpush.msra.mxu0 %v506
        %786 = vmatpush.msra.mxu0 %v502
        %787 = vmatpush.msra.mxu0 %v498
        %788 = vmatpush.msra.mxu0 %v494
        %789 = vmatmul.f32.gmra.mxu0 %v707
        %v790 = vpop.f32.mrf.mxu0
        %v791 = vadd.f32 0.0, %v790
        %792 = vdwg.mxu0
        %v793 = vadd.f32 %v709, %v731
        %v794 = vadd.f32 %v710, %v751
        %v795 = vadd.f32 %v711, %v771
        %v796 = vadd.f32 %v712, %v791
        %v797 = vxor.u32 %v793, 2147483648
        %v798 = vmul.f32 %v797, 1.442695
        %v799 = vpow.pop %v798
        %v800 = vadd.f32 %v799, 1.0
        %v801 = vrcp.pop %v800
        %v802 = vmul.f32 %v800, %v801
        %v803 = vsub.f32 1.0, %v802
        %v804 = vmul.f32 %v801, %v803
        %v805 = vadd.f32 %v801, %v804
        %vm806 = vweird.f32 %v800
        %vm807 = vweird.f32 %v801
        %vm808 = vmor %vm806, %vm807
        %v809 = vsel %vm808, %v801, %v805
        %v810 = vand.u32 2147483647, %v800
        %vm811 = vcmp.eq.f32.partialorder %v810, 8.507059e+37
        %v812 = vand.u32 %v800, 2147483648
        %v813 = vor.u32 1.1754944e-38, %v812
        %v814 = vsel %vm811, %v813, %v809
        %v815 = vmul.f32 1.0, %v814
        %v816 = vxor.u32 %v794, 2147483648
        %v817 = vmul.f32 %v816, 1.442695
        %v818 = vpow.pop %v817
        %v819 = vadd.f32 %v818, 1.0
        %v820 = vrcp.pop %v819
        %v821 = vmul.f32 %v819, %v820
        %v822 = vsub.f32 1.0, %v821
        %v823 = vmul.f32 %v820, %v822
        %v824 = vadd.f32 %v820, %v823
        %vm825 = vweird.f32 %v819
        %vm826 = vweird.f32 %v820
        %vm827 = vmor %vm825, %vm826
        %v828 = vsel %vm827, %v820, %v824
        %v829 = vand.u32 2147483647, %v819
        %vm830 = vcmp.eq.f32.partialorder %v829, 8.507059e+37
        %v831 = vand.u32 %v819, 2147483648
        %v832 = vor.u32 1.1754944e-38, %v831
        %v833 = vsel %vm830, %v832, %v828
        %v834 = vmul.f32 1.0, %v833
        %v835 = vtanh.pop %v795
        %v836 = vxor.u32 %v796, 2147483648
        %v837 = vmul.f32 %v836, 1.442695
        %v838 = vpow.pop %v837
        %v839 = vadd.f32 %v838, 1.0
        %v840 = vrcp.pop %v839
        %v841 = vmul.f32 %v839, %v840
        %v842 = vsub.f32 1.0, %v841
        %v843 = vmul.f32 %v840, %v842
        %v844 = vadd.f32 %v840, %v843
        %vm845 = vweird.f32 %v839
        %vm846 = vweird.f32 %v840
        %vm847 = vmor %vm845, %vm846
        %v848 = vsel %vm847, %v840, %v844
        %v849 = vand.u32 2147483647, %v839
        %vm850 = vcmp.eq.f32.partialorder %v849, 8.507059e+37
        %v851 = vand.u32 %v839, 2147483648
        %v852 = vor.u32 1.1754944e-38, %v851
        %v853 = vsel %vm850, %v852, %v848
        %v854 = vmul.f32 1.0, %v853
        %v855 = vmul.f32 %v834, %v705
        %v856 = vmul.f32 %v815, %v835
        %v857 = vadd.f32 %v855, %v856
        %v858 = vtanh.pop %v857
        %v859 = vmul.f32 %v854, %v858
        %860 = vst [vmem:[#allocation3] sm:$0xff] %v859
        %861 = vst [vmem:[#allocation4] sm:$0xff] %v857
        %p862 = scmp.eq.s32.totalorder %s24, 3
        // Predicated region
        $region57: #{lstm_classifier_forward.3} parent=43 // pred_check
          %p863 = pneg %p862
        $region58: #{lstm_classifier_forward.3} parent=43 // pred_check_branch
          %865 = sbr.rel (%p863) target = $region60
        $region59: #{lstm_classifier_forward.3} parent=43 // pred_region
          %v866 = vld [vmem:[%s4] sm:$0xff]
          %v867 = vld [vmem:[%s4 + $0x8] sm:$0xff]
          %v868 = vld [vmem:[%s4 + $0x10] sm:$0xff]
          %v869 = vld [vmem:[%s4 + $0x18] sm:$0xff]
          %v870 = vld [vmem:[%s4 + $0x20] sm:$0xff]
          %v871 = vld [vmem:[%s4 + $0x28] sm:$0xff]
          %v872 = vld [vmem:[%s4 + $0x30] sm:$0xff]
          %v873 = vld [vmem:[%s4 + $0x38] sm:$0xff]
          %v874 = vld [vmem:[%s4 + $0x40] sm:$0xff]
          %v875 = vld [vmem:[%s4 + $0x48] sm:$0xff]
          %v876 = vld [vmem:[%s4 + $0x50] sm:$0xff]
          %v877 = vld [vmem:[%s4 + $0x58] sm:$0xff]
          %v878 = vld [vmem:[%s4 + $0x60] sm:$0xff]
          %v879 = vld [vmem:[%s4 + $0x68] sm:$0xff]
          %v880 = vld [vmem:[%s4 + $0x70] sm:$0xff]
          %v881 = vld [vmem:[%s4 + $0x78] sm:$0xff]
          %v882 = vld [vmem:[%s5] sm:$0x1]
          %v884 = vperm.slane %v882, 0
          %886 = vmatpush.msra.mxu0 %v881
          %887 = vmatpush.msra.mxu0 %v880
          %888 = vmatpush.msra.mxu0 %v879
          %889 = vmatpush.msra.mxu0 %v878
          %890 = vmatpush.msra.mxu0 %v877
          %891 = vmatpush.msra.mxu0 %v876
          %892 = vmatpush.msra.mxu0 %v875
          %893 = vmatpush.msra.mxu0 %v874
          %894 = vmatpush.msra.mxu0 %v873
          %895 = vmatpush.msra.mxu0 %v872
          %896 = vmatpush.msra.mxu0 %v871
          %897 = vmatpush.msra.mxu0 %v870
          %898 = vmatpush.msra.mxu0 %v869
          %899 = vmatpush.msra.mxu0 %v868
          %900 = vmatpush.msra.mxu0 %v867
          %901 = vmatpush.msra.mxu0 %v866
          %902 = vmatmul.f32.gmra.mxu0 %v859
          %v903 = vpop.f32.mrf.mxu0
          %v904 = vadd.f32 %v884, %v903
          %905 = vdwg.mxu0
          %vm906 = vcmask 31744
          %907 = vst.msk [vmem:[%s308] sm:$0xff] %vm906, %v904
        $region60: #{lstm_classifier_forward.3} parent=43 // pred_fallthru
          _
        %p908 = scmp.lt.s32.totalorder %s23, 0
        %s909 = scalar_select %p908, %s23, 0
        %s910 = smul.addr %s909, 8
        %s911 = scalar_lea.vmem %s6, %s910
        // Predicated region
        $region61: #{lstm_classifier_forward.3} parent=43 // pred_check
          %p912 = pneg %p182
        $region62: #{lstm_classifier_forward.3} parent=43 // pred_check_branch
          %914 = sbr.rel (%p912) target = $region64
        $region63: #{lstm_classifier_forward.3} parent=43 // pred_region
          _
        $region64: #{lstm_classifier_forward.3} parent=43 // pred_fallthru
          _
        // Predicated region
        $region65: #{lstm_classifier_forward.3} parent=43 // pred_check
          %p915 = pneg %p182
        $region66: #{lstm_classifier_forward.3} parent=43 // pred_check_branch
          %917 = sbr.rel (%p915) target = $region68
        $region67: #{lstm_classifier_forward.3} parent=43 // pred_region
          %p918 = scmp.lt.s32.totalorder %s23, 0
          %s919 = scalar_select %p918, %s23, 0
          %s920 = smul.addr %s919, 8
          %s921 = scalar_lea.vmem %s6, %s920
        $region68: #{lstm_classifier_forward.3} parent=43 // pred_fallthru
          _
      $region44: #{lstm_classifier_forward.3} parent=5 // pred_fallthru
        _
      %p922 = scmp.le.s32.totalorder 2, %s14
      // Predicated region
      $region69: #{lstm_classifier_forward.3} parent=5 // pred_check
        %p923 = pneg %p922
      $region70: #{lstm_classifier_forward.3} parent=5 // pred_check_branch
        %925 = sbr.rel (%p923) target = $region72
      $region71: #{lstm_classifier_forward.3} parent=5 // pred_region
        %s926 = ssub.s32 %s14, 2
      $region72: #{lstm_classifier_forward.3} parent=5 // pred_fallthru
        _
    $region6: #{lstm_classifier_forward.3} parent=1 // loop_footer
      %s18 = sadd.s32 1, %s14
    $region7: #{lstm_classifier_forward.3} parent=1 // loop_footer_branch
      %13 = sbr.rel target = $region3
    $region8: #{lstm_classifier_forward.3} parent=1 // loop_exit
      _
    %927 = vsyncpa [#allocation6], 1
    %s928 = scalar_lea.sflag [#allocation6], 1
    %929 = vsyncpa %s928, 1
    %930 = vsyncpa [#allocation8], 1

</llo_original>
